<compile_context>
chip_gen: v5e
topology: v5e:2x2
jax: 0.10.0
libtpu: 0.0.40
codegen_flags: <defaults>
</compile_context>

<pallas_src>
import math

import numpy as np
import jax
import jax.numpy as jnp
from jax import lax
from jax.experimental import pallas as pl
from jax.experimental.pallas import tpu as pltpu

# ---- hyper-parameters (mirror NeuralNet(embedding_matrix, num_unit)) -------
NTOKEN   = 100                    # vocab size of embedding_matrix
D_MODEL  = 40                     # embedding dim == num_unit (required so that
NUM_UNIT = D_MODEL                # Linear(num_unit*2, num_unit) matches cat(max,avg))
N_HEAD   = 5                      # TransEncoder default nhead
HEAD_DIM = D_MODEL // N_HEAD
D_FF     = 1024                   # TransEncoder default d_hid
N_LAYERS = 10                     # TransEncoder default nlayers
LN_EPS   = 1e-5
N_AUX    = 26
SEQ_LEN  = 8
BATCH    = 2
N_ROWS   = BATCH * SEQ_LEN        # batch folded into the row (sublane) axis
MAX_LEN  = 64                     # PE table length (only first SEQ_LEN rows used)
OUT_PAD  = 128                    # lane-dense packed head output width


# ------------------------------ kernel ---------------------------------------
def _layer_norm(y, w, b):
    mu = jnp.mean(y, axis=-1, keepdims=True)
    var = jnp.mean(jnp.square(y - mu), axis=-1, keepdims=True)
    return (y - mu) * jax.lax.rsqrt(var + LN_EPS) * w + b


def fused_kernel(tok_ref, emb_ref, pe_ref,
                 wqkv_ref, bqkv_ref, wo_ref, bo_ref,
                 ln1w_ref, ln1b_ref, ln2w_ref, ln2b_ref,
                 wff1_ref, bff1_ref, wff2_ref, bff2_ref,
                 w1m_ref, w1a_ref, b12_ref, wcomb_ref, bcomb_ref,
                 out_ref):
    """Whole forward pass: embedding gather + PE, 10 post-norm encoder layers
    (weights resident, fori_loop over the stacked leading axis), batch-dim
    pooling and the two sigmoid heads, all in one kernel invocation."""

    # --- embedding gather (+ sqrt(D) scale) + positional encoding -----------
    rows = []
    for r in range(N_ROWS):                       # rows are (b, s), b-major
        b, s = divmod(r, SEQ_LEN)
        tok = tok_ref[s, b]                       # scalar token id from SMEM
        rows.append(emb_ref[pl.ds(tok, 1), :])    # (1, D) dynamic row gather
    x0 = jnp.concatenate(rows, axis=0) * math.sqrt(D_MODEL) + pe_ref[...]

    scale = 1.0 / math.sqrt(HEAD_DIM)

    # --- one post-norm TransformerEncoderLayer on the (B*S, D) activation ---
    def layer_body(l, x):
        xb = x.astype(jnp.bfloat16)
        # fused QKV: one (N, D) x (D, 3D) matmul, f32 accumulation
        qkv = jnp.dot(xb, wqkv_ref[l],
                      preferred_element_type=jnp.float32) + bqkv_ref[l]   # (N, 3D)
        heads = []
        for h in range(N_HEAD):
            q = qkv[:, h * HEAD_DIM:(h + 1) * HEAD_DIM]
            k = qkv[:, D_MODEL + h * HEAD_DIM:D_MODEL + (h + 1) * HEAD_DIM]
            v = qkv[:, 2 * D_MODEL + h * HEAD_DIM:2 * D_MODEL + (h + 1) * HEAD_DIM]
            qb = q.reshape(BATCH, SEQ_LEN, HEAD_DIM).astype(jnp.bfloat16)
            kb = k.reshape(BATCH, SEQ_LEN, HEAD_DIM).astype(jnp.bfloat16)
            vb = v.reshape(BATCH, SEQ_LEN, HEAD_DIM).astype(jnp.bfloat16)
            s_ = jnp.einsum("bqd,bkd->bqk", qb, kb,
                            preferred_element_type=jnp.float32) * scale   # (B,S,S) f32
            s_ = s_ - jnp.max(s_, axis=-1, keepdims=True)
            p = jnp.exp(s_)
            p = p * pl.reciprocal(jnp.sum(p, axis=-1, keepdims=True), approx=True)
            oh = jnp.einsum("bqk,bkd->bqd", p.astype(jnp.bfloat16), vb,
                            preferred_element_type=jnp.float32)           # (B,S,Hd)
            heads.append(oh.reshape(N_ROWS, HEAD_DIM))
        # fused output projection: heads lane-contiguous, one (D, D) matmul
        attn_cat = jnp.concatenate(heads, axis=1)                         # (N, D)
        attn = jnp.dot(attn_cat.astype(jnp.bfloat16), wo_ref[l],
                       preferred_element_type=jnp.float32) + bo_ref[l]

        y = _layer_norm(x + attn, ln1w_ref[l], ln1b_ref[l])

        yb = y.astype(jnp.bfloat16)
        h1 = jnp.maximum(jnp.dot(yb, wff1_ref[l],
                                 preferred_element_type=jnp.float32) + bff1_ref[l], 0.0)
        ff = jnp.dot(h1.astype(jnp.bfloat16), wff2_ref[l],
                     preferred_element_type=jnp.float32) + bff2_ref[l]

        return _layer_norm(y + ff, ln2w_ref[l], ln2b_ref[l])

    x = lax.fori_loop(0, N_LAYERS, layer_body, x0)

    # --- pooling over the batch dim + fused linear heads --------------------
    mx = x[0:SEQ_LEN]
    sm = x[0:SEQ_LEN]
    for b in range(1, BATCH):
        blk = x[b * SEQ_LEN:(b + 1) * SEQ_LEN]
        mx = jnp.maximum(mx, blk)
        sm = sm + blk
    av = sm * (1.0 / BATCH)                                               # (S, D)

    # combined linear1|linear2 (split weights avoid the max|avg lane concat)
    h12 = jnp.maximum(
        jnp.dot(mx.astype(jnp.bfloat16), w1m_ref[...],
                preferred_element_type=jnp.float32)
        + jnp.dot(av.astype(jnp.bfloat16), w1a_ref[...],
                  preferred_element_type=jnp.float32)
        + b12_ref[...], 0.0)                                              # (S, 2*NU)
    # combined, zero-padded second stage -> lane-dense (S, 128) output
    logits = jnp.dot(h12.astype(jnp.bfloat16), wcomb_ref[...],
                     preferred_element_type=jnp.float32) + bcomb_ref[...]
    out_ref[...] = jax.nn.sigmoid(logits)


# ------------------------------ wrapper ---------------------------------------
def neural_net_forward(tokens, emb_matrix, pe_slab, P):
    """tokens: (S, B) int32 — seq-first like the PyTorch module."""
    layer_args = (P["wqkv"], P["bqkv"], P["wo"], P["bo"],
                  P["ln1w"], P["ln1b"], P["ln2w"], P["ln2b"],
                  P["wff1"], P["bff1"], P["wff2"], P["bff2"])
    head_args = (P["w1m"], P["w1a"], P["b12"], P["wcomb"], P["bcomb"])

    n_vmem_inputs = 2 + len(layer_args) + len(head_args)   # emb, pe, weights
    in_specs = ([pl.BlockSpec(memory_space=pltpu.MemorySpace.SMEM)]         # tokens
                + [pl.BlockSpec(memory_space=pltpu.MemorySpace.VMEM)
                   for _ in range(n_vmem_inputs)])

    out_packed = pl.pallas_call(
        fused_kernel,
        out_shape=jax.ShapeDtypeStruct((SEQ_LEN, OUT_PAD), jnp.float32),
        in_specs=in_specs,
        out_specs=pl.BlockSpec(memory_space=pltpu.MemorySpace.VMEM),
        compiler_params=pltpu.CompilerParams(vmem_limit_bytes=32 * 1024 * 1024),
    )(tokens, emb_matrix, pe_slab, *layer_args, *head_args)

    return out_packed[:, 0:1], out_packed[:, 1:1 + N_AUX]


# ------------------------- parameters / glue ---------------------------------
def make_positional_encoding(max_len, d_model):
    pos = np.arange(max_len, dtype=np.float32)[:, None]
    div = np.exp(np.arange(0, d_model, 2, dtype=np.float32)
                 * (-math.log(10000.0) / d_model))
    pe = np.zeros((max_len, d_model), np.float32)
    pe[:, 0::2] = np.sin(pos * div)
    pe[:, 1::2] = np.cos(pos * div)
    return pe


def init_params(key):
    """Random params in PyTorch layout, re-packed for the fused kernel:
    layers stacked on axis 0, QKV fused to (L, D, 3D), matmul weights
    pre-cast to bf16 (biases / LayerNorm stay f32)."""
    kl, kh = jax.random.split(key)
    n = jax.random.normal

    wqkv_l, bqkv_l, wo_l, bo_l = [], [], [], []
    ln1w_l, ln1b_l, ln2w_l, ln2b_l = [], [], [], []
    wff1_l, bff1_l, wff2_l, bff2_l = [], [], [], []

    for lk in jax.random.split(kl, N_LAYERS):
        ks = jax.random.split(lk, 8)
        w_in  = 0.05 * n(ks[0], (3 * D_MODEL, D_MODEL), jnp.float32)   # in_proj_weight
        b_in  = 0.02 * n(ks[1], (3 * D_MODEL,), jnp.float32)
        w_out = 0.05 * n(ks[2], (D_MODEL, D_MODEL), jnp.float32)       # out_proj.weight
        b_out = 0.02 * n(ks[3], (D_MODEL,), jnp.float32)
        w_ff1 = 0.05 * n(ks[4], (D_FF, D_MODEL), jnp.float32)
        b_ff1 = 0.02 * n(ks[5], (D_FF,), jnp.float32)
        w_ff2 = 0.05 * n(ks[6], (D_MODEL, D_FF), jnp.float32)
        b_ff2 = 0.02 * n(ks[7], (D_MODEL,), jnp.float32)

        # fused QKV: columns [0:D]=Q, [D:2D]=K, [2D:3D]=V, head h at h*Hd:(h+1)*Hd
        wqkv_l.append(w_in.T)                              # (D, 3D)
        bqkv_l.append(b_in.reshape(1, 3 * D_MODEL))
        wo_l.append(w_out.T)                               # (D, D)
        bo_l.append(b_out.reshape(1, D_MODEL))
        ln1w_l.append(jnp.ones((1, D_MODEL), jnp.float32))
        ln1b_l.append(jnp.zeros((1, D_MODEL), jnp.float32))
        ln2w_l.append(jnp.ones((1, D_MODEL), jnp.float32))
        ln2b_l.append(jnp.zeros((1, D_MODEL), jnp.float32))
        wff1_l.append(w_ff1.T); bff1_l.append(b_ff1.reshape(1, D_FF))
        wff2_l.append(w_ff2.T); bff2_l.append(b_ff2.reshape(1, D_MODEL))

    hk = jax.random.split(kh, 8)
    w1   = 0.05 * n(hk[0], (NUM_UNIT, 2 * NUM_UNIT), jnp.float32)
    b1   = 0.02 * n(hk[1], (NUM_UNIT,), jnp.float32)
    w2   = 0.05 * n(hk[2], (NUM_UNIT, 2 * NUM_UNIT), jnp.float32)
    b2   = 0.02 * n(hk[3], (NUM_UNIT,), jnp.float32)
    wout = 0.05 * n(hk[4], (1, NUM_UNIT), jnp.float32)
    bout = 0.02 * n(hk[5], (1,), jnp.float32)
    waux = 0.05 * n(hk[6], (N_AUX, NUM_UNIT), jnp.float32)
    baux = 0.02 * n(hk[7], (N_AUX,), jnp.float32)

    # combined linear1|linear2, split into the max-pool half and avg-pool half
    w12_t = jnp.concatenate([w1.T, w2.T], axis=1)        # (2NU, 2NU)
    w1m = w12_t[:NUM_UNIT]                               # multiplies max_pool
    w1a = w12_t[NUM_UNIT:]                               # multiplies avg_pool
    b12 = jnp.concatenate([b1, b2]).reshape(1, 2 * NUM_UNIT)

    # combined, lane-dense second stage: col 0 = linear_out, cols 1..26 = aux
    wcomb = jnp.zeros((2 * NUM_UNIT, OUT_PAD), jnp.float32)
    wcomb = wcomb.at[:NUM_UNIT, 0:1].set(wout.T)
    wcomb = wcomb.at[NUM_UNIT:, 1:1 + N_AUX].set(waux.T)
    bcomb = jnp.zeros((1, OUT_PAD), jnp.float32)
    bcomb = bcomb.at[0, 0].set(bout[0])
    bcomb = bcomb.at[0, 1:1 + N_AUX].set(baux)

    bf = lambda a: a.astype(jnp.bfloat16)
    return dict(
        wqkv=bf(jnp.stack(wqkv_l)), bqkv=jnp.stack(bqkv_l),
        wo=bf(jnp.stack(wo_l)),     bo=jnp.stack(bo_l),
        ln1w=jnp.stack(ln1w_l), ln1b=jnp.stack(ln1b_l),
        ln2w=jnp.stack(ln2w_l), ln2b=jnp.stack(ln2b_l),
        wff1=bf(jnp.stack(wff1_l)), bff1=jnp.stack(bff1_l),
        wff2=bf(jnp.stack(wff2_l)), bff2=jnp.stack(bff2_l),
        w1m=bf(w1m), w1a=bf(w1a), b12=b12,
        wcomb=bf(wcomb), bcomb=bcomb,
    )


# --------------------------- pure-JAX reference -------------------------------
# Mirrors the kernel's bf16-operand / f32-accumulation numerics so the check
# validates structure, not f32-vs-bf16 precision.
def neural_net_ref(tokens, emb_matrix, pe_slab, P):
    f32, bf16 = jnp.float32, jnp.bfloat16
    tok_flat = tokens.T.reshape(-1)                              # (B*S,), b-major
    x = emb_matrix[tok_flat] * math.sqrt(D_MODEL) + pe_slab      # (B*S, D)
    scale = 1.0 / math.sqrt(HEAD_DIM)

    for l in range(N_LAYERS):
        xb = x.astype(bf16)
        qkv = jnp.dot(xb, P["wqkv"][l], preferred_element_type=f32) + P["bqkv"][l]
        heads = []
        for h in range(N_HEAD):
            q = qkv[:, h * HEAD_DIM:(h + 1) * HEAD_DIM]
            k = qkv[:, D_MODEL + h * HEAD_DIM:D_MODEL + (h + 1) * HEAD_DIM]
            v = qkv[:, 2 * D_MODEL + h * HEAD_DIM:2 * D_MODEL + (h + 1) * HEAD_DIM]
            qb = q.reshape(BATCH, SEQ_LEN, HEAD_DIM).astype(bf16)
            kb = k.reshape(BATCH, SEQ_LEN, HEAD_DIM).astype(bf16)
            vb = v.reshape(BATCH, SEQ_LEN, HEAD_DIM).astype(bf16)
            s = jnp.einsum("bqd,bkd->bqk", qb, kb, preferred_element_type=f32) * scale
            p = jax.nn.softmax(s, axis=-1)
            oh = jnp.einsum("bqk,bkd->bqd", p.astype(bf16), vb, preferred_element_type=f32)
            heads.append(oh.reshape(N_ROWS, HEAD_DIM))
        attn = jnp.dot(jnp.concatenate(heads, axis=1).astype(bf16), P["wo"][l],
                       preferred_element_type=f32) + P["bo"][l]
        y = _layer_norm(x + attn, P["ln1w"][l], P["ln1b"][l])
        yb = y.astype(bf16)
        h1 = jax.nn.relu(jnp.dot(yb, P["wff1"][l], preferred_element_type=f32) + P["bff1"][l])
        ff = jnp.dot(h1.astype(bf16), P["wff2"][l], preferred_element_type=f32) + P["bff2"][l]
        x = _layer_norm(y + ff, P["ln2w"][l], P["ln2b"][l])

    e = x.reshape(BATCH, SEQ_LEN, D_MODEL)
    mx = jnp.max(e, axis=0)
    av = jnp.mean(e, axis=0)
    h12 = jax.nn.relu(jnp.dot(mx.astype(bf16), P["w1m"], preferred_element_type=f32)
                      + jnp.dot(av.astype(bf16), P["w1a"], preferred_element_type=f32)
                      + P["b12"])
    logits = jnp.dot(h12.astype(bf16), P["wcomb"], preferred_element_type=f32) + P["bcomb"]
    out = jax.nn.sigmoid(logits)
    return out[:, 0:1], out[:, 1:1 + N_AUX]


# ------------------------------------ main ------------------------------------
if __name__ == "__main__":
    key = jax.random.PRNGKey(0)
    k_emb, k_tok, k_par = jax.random.split(key, 3)

    emb_matrix = jax.random.uniform(k_emb, (NTOKEN, D_MODEL), jnp.float32, -0.1, 0.1)
    tokens = jax.random.randint(k_tok, (SEQ_LEN, BATCH), 0, NTOKEN, dtype=jnp.int32)
    P = init_params(k_par)
    # PE rows in the kernel's (b, s) row order: row r = b*S + s -> pe[s]
    pe_slab = jnp.asarray(
        np.tile(make_positional_encoding(MAX_LEN, D_MODEL)[:SEQ_LEN], (BATCH, 1)))

    fwd = jax.jit(neural_net_forward)
    out1, out2 = fwd(tokens, emb_matrix, pe_slab, P)
    jax.block_until_ready((out1, out2))

    assert out1.shape == (SEQ_LEN, 1) and out2.shape == (SEQ_LEN, N_AUX)

    r1, r2 = neural_net_ref(tokens, emb_matrix, pe_slab, P)
    np.testing.assert_allclose(np.asarray(out1), np.asarray(r1), atol=1e-2, rtol=1e-2)
    np.testing.assert_allclose(np.asarray(out2), np.asarray(r2), atol=1e-2, rtol=1e-2)

    print("KERNEL_OK")
</pallas_src>

<mosaic_0001>
module attributes {stable_mosaic.version = 11 : i64} {
  func.func @fused_kernel(%arg0: memref<8x2xi32, #tpu.memory_space<smem>>, %arg1: memref<100x40xf32, #tpu.memory_space<vmem>>, %arg2: memref<16x40xf32, #tpu.memory_space<vmem>>, %arg3: memref<10x40x120xbf16, #tpu.memory_space<vmem>>, %arg4: memref<10x1x120xf32, #tpu.memory_space<vmem>>, %arg5: memref<10x40x40xbf16, #tpu.memory_space<vmem>>, %arg6: memref<10x1x40xf32, #tpu.memory_space<vmem>>, %arg7: memref<10x1x40xf32, #tpu.memory_space<vmem>>, %arg8: memref<10x1x40xf32, #tpu.memory_space<vmem>>, %arg9: memref<10x1x40xf32, #tpu.memory_space<vmem>>, %arg10: memref<10x1x40xf32, #tpu.memory_space<vmem>>, %arg11: memref<10x40x1024xbf16, #tpu.memory_space<vmem>>, %arg12: memref<10x1x1024xf32, #tpu.memory_space<vmem>>, %arg13: memref<10x1024x40xbf16, #tpu.memory_space<vmem>>, %arg14: memref<10x1x40xf32, #tpu.memory_space<vmem>>, %arg15: memref<40x80xbf16, #tpu.memory_space<vmem>>, %arg16: memref<40x80xbf16, #tpu.memory_space<vmem>>, %arg17: memref<1x80xf32, #tpu.memory_space<vmem>>, %arg18: memref<80x128xbf16, #tpu.memory_space<vmem>>, %arg19: memref<1x128xf32, #tpu.memory_space<vmem>>, %arg20: memref<8x128xf32, #tpu.memory_space<vmem>>) attributes {dimension_semantics = [], scalar_prefetch = 0 : i64, scratch_operands = 0 : i64, tpu.core_type = #tpu.core_type<tc>} {
    %c0 = arith.constant 0 : index
    %c0_0 = arith.constant 0 : index
    %0 = memref.load %arg0[%c0, %c0_0] : memref<8x2xi32, #tpu.memory_space<smem>>
    %1 = arith.index_cast %0 : i32 to index
    %c0_1 = arith.constant 0 : index
    %2 = vector.load %arg1[%1, %c0_1] : memref<100x40xf32, #tpu.memory_space<vmem>>, vector<1x40xf32>
    %c1 = arith.constant 1 : index
    %c0_2 = arith.constant 0 : index
    %3 = memref.load %arg0[%c1, %c0_2] : memref<8x2xi32, #tpu.memory_space<smem>>
    %4 = arith.index_cast %3 : i32 to index
    %c0_3 = arith.constant 0 : index
    %5 = vector.load %arg1[%4, %c0_3] : memref<100x40xf32, #tpu.memory_space<vmem>>, vector<1x40xf32>
    %c2 = arith.constant 2 : index
    %c0_4 = arith.constant 0 : index
    %6 = memref.load %arg0[%c2, %c0_4] : memref<8x2xi32, #tpu.memory_space<smem>>
    %7 = arith.index_cast %6 : i32 to index
    %c0_5 = arith.constant 0 : index
    %8 = vector.load %arg1[%7, %c0_5] : memref<100x40xf32, #tpu.memory_space<vmem>>, vector<1x40xf32>
    %c3 = arith.constant 3 : index
    %c0_6 = arith.constant 0 : index
    %9 = memref.load %arg0[%c3, %c0_6] : memref<8x2xi32, #tpu.memory_space<smem>>
    %10 = arith.index_cast %9 : i32 to index
    %c0_7 = arith.constant 0 : index
    %11 = vector.load %arg1[%10, %c0_7] : memref<100x40xf32, #tpu.memory_space<vmem>>, vector<1x40xf32>
    %c4 = arith.constant 4 : index
    %c0_8 = arith.constant 0 : index
    %12 = memref.load %arg0[%c4, %c0_8] : memref<8x2xi32, #tpu.memory_space<smem>>
    %13 = arith.index_cast %12 : i32 to index
    %c0_9 = arith.constant 0 : index
    %14 = vector.load %arg1[%13, %c0_9] : memref<100x40xf32, #tpu.memory_space<vmem>>, vector<1x40xf32>
    %c5 = arith.constant 5 : index
    %c0_10 = arith.constant 0 : index
    %15 = memref.load %arg0[%c5, %c0_10] : memref<8x2xi32, #tpu.memory_space<smem>>
    %16 = arith.index_cast %15 : i32 to index
    %c0_11 = arith.constant 0 : index
    %17 = vector.load %arg1[%16, %c0_11] : memref<100x40xf32, #tpu.memory_space<vmem>>, vector<1x40xf32>
    %c6 = arith.constant 6 : index
    %c0_12 = arith.constant 0 : index
    %18 = memref.load %arg0[%c6, %c0_12] : memref<8x2xi32, #tpu.memory_space<smem>>
    %19 = arith.index_cast %18 : i32 to index
    %c0_13 = arith.constant 0 : index
    %20 = vector.load %arg1[%19, %c0_13] : memref<100x40xf32, #tpu.memory_space<vmem>>, vector<1x40xf32>
    %c7 = arith.constant 7 : index
    %c0_14 = arith.constant 0 : index
    %21 = memref.load %arg0[%c7, %c0_14] : memref<8x2xi32, #tpu.memory_space<smem>>
    %22 = arith.index_cast %21 : i32 to index
    %c0_15 = arith.constant 0 : index
    %23 = vector.load %arg1[%22, %c0_15] : memref<100x40xf32, #tpu.memory_space<vmem>>, vector<1x40xf32>
    %c0_16 = arith.constant 0 : index
    %c1_17 = arith.constant 1 : index
    %24 = memref.load %arg0[%c0_16, %c1_17] : memref<8x2xi32, #tpu.memory_space<smem>>
    %25 = arith.index_cast %24 : i32 to index
    %c0_18 = arith.constant 0 : index
    %26 = vector.load %arg1[%25, %c0_18] : memref<100x40xf32, #tpu.memory_space<vmem>>, vector<1x40xf32>
    %c1_19 = arith.constant 1 : index
    %c1_20 = arith.constant 1 : index
    %27 = memref.load %arg0[%c1_19, %c1_20] : memref<8x2xi32, #tpu.memory_space<smem>>
    %28 = arith.index_cast %27 : i32 to index
    %c0_21 = arith.constant 0 : index
    %29 = vector.load %arg1[%28, %c0_21] : memref<100x40xf32, #tpu.memory_space<vmem>>, vector<1x40xf32>
    %c2_22 = arith.constant 2 : index
    %c1_23 = arith.constant 1 : index
    %30 = memref.load %arg0[%c2_22, %c1_23] : memref<8x2xi32, #tpu.memory_space<smem>>
    %31 = arith.index_cast %30 : i32 to index
    %c0_24 = arith.constant 0 : index
    %32 = vector.load %arg1[%31, %c0_24] : memref<100x40xf32, #tpu.memory_space<vmem>>, vector<1x40xf32>
    %c3_25 = arith.constant 3 : index
    %c1_26 = arith.constant 1 : index
    %33 = memref.load %arg0[%c3_25, %c1_26] : memref<8x2xi32, #tpu.memory_space<smem>>
    %34 = arith.index_cast %33 : i32 to index
    %c0_27 = arith.constant 0 : index
    %35 = vector.load %arg1[%34, %c0_27] : memref<100x40xf32, #tpu.memory_space<vmem>>, vector<1x40xf32>
    %c4_28 = arith.constant 4 : index
    %c1_29 = arith.constant 1 : index
    %36 = memref.load %arg0[%c4_28, %c1_29] : memref<8x2xi32, #tpu.memory_space<smem>>
    %37 = arith.index_cast %36 : i32 to index
    %c0_30 = arith.constant 0 : index
    %38 = vector.load %arg1[%37, %c0_30] : memref<100x40xf32, #tpu.memory_space<vmem>>, vector<1x40xf32>
    %c5_31 = arith.constant 5 : index
    %c1_32 = arith.constant 1 : index
    %39 = memref.load %arg0[%c5_31, %c1_32] : memref<8x2xi32, #tpu.memory_space<smem>>
    %40 = arith.index_cast %39 : i32 to index
    %c0_33 = arith.constant 0 : index
    %41 = vector.load %arg1[%40, %c0_33] : memref<100x40xf32, #tpu.memory_space<vmem>>, vector<1x40xf32>
    %c6_34 = arith.constant 6 : index
    %c1_35 = arith.constant 1 : index
    %42 = memref.load %arg0[%c6_34, %c1_35] : memref<8x2xi32, #tpu.memory_space<smem>>
    %43 = arith.index_cast %42 : i32 to index
    %c0_36 = arith.constant 0 : index
    %44 = vector.load %arg1[%43, %c0_36] : memref<100x40xf32, #tpu.memory_space<vmem>>, vector<1x40xf32>
    %c7_37 = arith.constant 7 : index
    %c1_38 = arith.constant 1 : index
    %45 = memref.load %arg0[%c7_37, %c1_38] : memref<8x2xi32, #tpu.memory_space<smem>>
    %46 = arith.index_cast %45 : i32 to index
    %c0_39 = arith.constant 0 : index
    %47 = vector.load %arg1[%46, %c0_39] : memref<100x40xf32, #tpu.memory_space<vmem>>, vector<1x40xf32>
    %48 = tpu.concatenate %2, %5, %8, %11, %14, %17, %20, %23, %26, %29, %32, %35, %38, %41, %44, %47 in 0 : vector<1x40xf32>, vector<1x40xf32>, vector<1x40xf32>, vector<1x40xf32>, vector<1x40xf32>, vector<1x40xf32>, vector<1x40xf32>, vector<1x40xf32>, vector<1x40xf32>, vector<1x40xf32>, vector<1x40xf32>, vector<1x40xf32>, vector<1x40xf32>, vector<1x40xf32>, vector<1x40xf32>, vector<1x40xf32> -> vector<16x40xf32>
    %cst = arith.constant 6.32455539 : f32
    %49 = vector.broadcast %cst : f32 to vector<16x40xf32>
    %50 = arith.mulf %48, %49 : vector<16x40xf32>
    %c0_40 = arith.constant 0 : index
    %c0_41 = arith.constant 0 : index
    %51 = vector.load %arg2[%c0_40, %c0_41] : memref<16x40xf32, #tpu.memory_space<vmem>>, vector<16x40xf32>
    %52 = arith.addf %50, %51 : vector<16x40xf32>
    %c0_i32 = arith.constant 0 : i32
    %c10_i32 = arith.constant 10 : i32
    %53 = arith.addi %c0_i32, %c10_i32 : i32
    %c1_i32 = arith.constant 1 : i32
    %54 = scf.for %arg21 = %c0_i32 to %53 step %c1_i32 iter_args(%arg22 = %52) -> (vector<16x40xf32>)  : i32 {
      %86 = arith.truncf %arg22 : vector<16x40xf32> to vector<16x40xbf16>
      %87 = arith.index_cast %arg21 : i32 to index
      %c0_61 = arith.constant 0 : index
      %c0_62 = arith.constant 0 : index
      %88 = vector.load %arg3[%87, %c0_61, %c0_62] : memref<10x40x120xbf16, #tpu.memory_space<vmem>>, vector<1x40x120xbf16>
      %89 = vector.shape_cast %88 : vector<1x40x120xbf16> to vector<40x120xbf16>
      %cst_63 = arith.constant dense<0.000000e+00> : vector<16x120xf32>
      %90 = tpu.matmul %86, %89, %cst_63 {dimension_numbers = #tpu.dot_dimension_numbers<[1], [0], [0], [1], [0, 0, 1, 1], [], []>} : vector<16x40xbf16>, vector<40x120xbf16>, vector<16x120xf32> -> vector<16x120xf32>
      %91 = arith.index_cast %arg21 : i32 to index
      %c0_64 = arith.constant 0 : index
      %c0_65 = arith.constant 0 : index
      %92 = vector.load %arg4[%91, %c0_64, %c0_65] : memref<10x1x120xf32, #tpu.memory_space<vmem>>, vector<1x1x120xf32>
      %93 = vector.shape_cast %92 : vector<1x1x120xf32> to vector<1x120xf32>
      %94 = vector.broadcast %93 : vector<1x120xf32> to vector<16x120xf32>
      %95 = arith.addf %90, %94 : vector<16x120xf32>
      %96 = vector.extract_strided_slice %95 {offsets = [0, 0], sizes = [16, 8], strides = [1, 1]} : vector<16x120xf32> to vector<16x8xf32>
      %97 = vector.extract_strided_slice %95 {offsets = [0, 40], sizes = [16, 8], strides = [1, 1]} : vector<16x120xf32> to vector<16x8xf32>
      %98 = vector.extract_strided_slice %95 {offsets = [0, 80], sizes = [16, 8], strides = [1, 1]} : vector<16x120xf32> to vector<16x8xf32>
      %99 = vector.shape_cast %96 : vector<16x8xf32> to vector<2x8x8xf32>
      %100 = arith.truncf %99 : vector<2x8x8xf32> to vector<2x8x8xbf16>
      %101 = vector.shape_cast %97 : vector<16x8xf32> to vector<2x8x8xf32>
      %102 = arith.truncf %101 : vector<2x8x8xf32> to vector<2x8x8xbf16>
      %103 = vector.shape_cast %98 : vector<16x8xf32> to vector<2x8x8xf32>
      %104 = arith.truncf %103 : vector<2x8x8xf32> to vector<2x8x8xbf16>
      "tpu.trace_start"() <{level = 10 : i32, message = "bqd,bkd->bqk"}> : () -> ()
      %cst_66 = arith.constant dense<0.000000e+00> : vector<2x8x8xf32>
      %105 = tpu.matmul %100, %102, %cst_66 {dimension_numbers = #tpu.dot_dimension_numbers<[2], [2], [1], [1], [0, 0, 0, 1, 1, 1], [0], [0]>} : vector<2x8x8xbf16>, vector<2x8x8xbf16>, vector<2x8x8xf32> -> vector<2x8x8xf32>
      "tpu.trace_stop"() : () -> ()
      %cst_67 = arith.constant 0.353553385 : f32
      %106 = vector.broadcast %cst_67 : f32 to vector<2x8x8xf32>
      %107 = arith.mulf %105, %106 : vector<2x8x8xf32>
      %cst_68 = arith.constant dense<0xFF800000> : vector<2x8xf32>
      %108 = vector.multi_reduction <maximumf>, %107, %cst_68 [2] : vector<2x8x8xf32> to vector<2x8xf32>
      %109 = vector.shape_cast %108 : vector<2x8xf32> to vector<2x8x1xf32>
      %110 = vector.broadcast %109 : vector<2x8x1xf32> to vector<2x8x8xf32>
      %111 = arith.subf %107, %110 : vector<2x8x8xf32>
      %112 = math.exp %111 : vector<2x8x8xf32>
      %cst_69 = arith.constant dense<0.000000e+00> : vector<2x8xf32>
      %113 = vector.multi_reduction <add>, %112, %cst_69 [2] : vector<2x8x8xf32> to vector<2x8xf32>
      %114 = vector.shape_cast %113 : vector<2x8xf32> to vector<2x8x1xf32>
      %115 = tpu.reciprocal %114 {approx = true} : vector<2x8x1xf32> -> vector<2x8x1xf32>
      %116 = vector.broadcast %115 : vector<2x8x1xf32> to vector<2x8x8xf32>
      %117 = arith.mulf %112, %116 : vector<2x8x8xf32>
      %118 = arith.truncf %117 : vector<2x8x8xf32> to vector<2x8x8xbf16>
      "tpu.trace_start"() <{level = 10 : i32, message = "bqk,bkd->bqd"}> : () -> ()
      %cst_70 = arith.constant dense<0.000000e+00> : vector<2x8x8xf32>
      %119 = tpu.matmul %118, %104, %cst_70 {dimension_numbers = #tpu.dot_dimension_numbers<[2], [1], [1], [2], [0, 0, 0, 1, 1, 2], [0], [0]>} : vector<2x8x8xbf16>, vector<2x8x8xbf16>, vector<2x8x8xf32> -> vector<2x8x8xf32>
      "tpu.trace_stop"() : () -> ()
      %120 = vector.shape_cast %119 : vector<2x8x8xf32> to vector<16x8xf32>
      %121 = vector.extract_strided_slice %95 {offsets = [0, 8], sizes = [16, 8], strides = [1, 1]} : vector<16x120xf32> to vector<16x8xf32>
      %122 = vector.extract_strided_slice %95 {offsets = [0, 48], sizes = [16, 8], strides = [1, 1]} : vector<16x120xf32> to vector<16x8xf32>
      %123 = vector.extract_strided_slice %95 {offsets = [0, 88], sizes = [16, 8], strides = [1, 1]} : vector<16x120xf32> to vector<16x8xf32>
      %124 = vector.shape_cast %121 : vector<16x8xf32> to vector<2x8x8xf32>
      %125 = arith.truncf %124 : vector<2x8x8xf32> to vector<2x8x8xbf16>
      %126 = vector.shape_cast %122 : vector<16x8xf32> to vector<2x8x8xf32>
      %127 = arith.truncf %126 : vector<2x8x8xf32> to vector<2x8x8xbf16>
      %128 = vector.shape_cast %123 : vector<16x8xf32> to vector<2x8x8xf32>
      %129 = arith.truncf %128 : vector<2x8x8xf32> to vector<2x8x8xbf16>
      "tpu.trace_start"() <{level = 10 : i32, message = "bqd,bkd->bqk"}> : () -> ()
      %cst_71 = arith.constant dense<0.000000e+00> : vector<2x8x8xf32>
      %130 = tpu.matmul %125, %127, %cst_71 {dimension_numbers = #tpu.dot_dimension_numbers<[2], [2], [1], [1], [0, 0, 0, 1, 1, 1], [0], [0]>} : vector<2x8x8xbf16>, vector<2x8x8xbf16>, vector<2x8x8xf32> -> vector<2x8x8xf32>
      "tpu.trace_stop"() : () -> ()
      %cst_72 = arith.constant 0.353553385 : f32
      %131 = vector.broadcast %cst_72 : f32 to vector<2x8x8xf32>
      %132 = arith.mulf %130, %131 : vector<2x8x8xf32>
      %cst_73 = arith.constant dense<0xFF800000> : vector<2x8xf32>
      %133 = vector.multi_reduction <maximumf>, %132, %cst_73 [2] : vector<2x8x8xf32> to vector<2x8xf32>
      %134 = vector.shape_cast %133 : vector<2x8xf32> to vector<2x8x1xf32>
      %135 = vector.broadcast %134 : vector<2x8x1xf32> to vector<2x8x8xf32>
      %136 = arith.subf %132, %135 : vector<2x8x8xf32>
      %137 = math.exp %136 : vector<2x8x8xf32>
      %cst_74 = arith.constant dense<0.000000e+00> : vector<2x8xf32>
      %138 = vector.multi_reduction <add>, %137, %cst_74 [2] : vector<2x8x8xf32> to vector<2x8xf32>
      %139 = vector.shape_cast %138 : vector<2x8xf32> to vector<2x8x1xf32>
      %140 = tpu.reciprocal %139 {approx = true} : vector<2x8x1xf32> -> vector<2x8x1xf32>
      %141 = vector.broadcast %140 : vector<2x8x1xf32> to vector<2x8x8xf32>
      %142 = arith.mulf %137, %141 : vector<2x8x8xf32>
      %143 = arith.truncf %142 : vector<2x8x8xf32> to vector<2x8x8xbf16>
      "tpu.trace_start"() <{level = 10 : i32, message = "bqk,bkd->bqd"}> : () -> ()
      %cst_75 = arith.constant dense<0.000000e+00> : vector<2x8x8xf32>
      %144 = tpu.matmul %143, %129, %cst_75 {dimension_numbers = #tpu.dot_dimension_numbers<[2], [1], [1], [2], [0, 0, 0, 1, 1, 2], [0], [0]>} : vector<2x8x8xbf16>, vector<2x8x8xbf16>, vector<2x8x8xf32> -> vector<2x8x8xf32>
      "tpu.trace_stop"() : () -> ()
      %145 = vector.shape_cast %144 : vector<2x8x8xf32> to vector<16x8xf32>
      %146 = vector.extract_strided_slice %95 {offsets = [0, 16], sizes = [16, 8], strides = [1, 1]} : vector<16x120xf32> to vector<16x8xf32>
      %147 = vector.extract_strided_slice %95 {offsets = [0, 56], sizes = [16, 8], strides = [1, 1]} : vector<16x120xf32> to vector<16x8xf32>
      %148 = vector.extract_strided_slice %95 {offsets = [0, 96], sizes = [16, 8], strides = [1, 1]} : vector<16x120xf32> to vector<16x8xf32>
      %149 = vector.shape_cast %146 : vector<16x8xf32> to vector<2x8x8xf32>
      %150 = arith.truncf %149 : vector<2x8x8xf32> to vector<2x8x8xbf16>
      %151 = vector.shape_cast %147 : vector<16x8xf32> to vector<2x8x8xf32>
      %152 = arith.truncf %151 : vector<2x8x8xf32> to vector<2x8x8xbf16>
      %153 = vector.shape_cast %148 : vector<16x8xf32> to vector<2x8x8xf32>
      %154 = arith.truncf %153 : vector<2x8x8xf32> to vector<2x8x8xbf16>
      "tpu.trace_start"() <{level = 10 : i32, message = "bqd,bkd->bqk"}> : () -> ()
      %cst_76 = arith.constant dense<0.000000e+00> : vector<2x8x8xf32>
      %155 = tpu.matmul %150, %152, %cst_76 {dimension_numbers = #tpu.dot_dimension_numbers<[2], [2], [1], [1], [0, 0, 0, 1, 1, 1], [0], [0]>} : vector<2x8x8xbf16>, vector<2x8x8xbf16>, vector<2x8x8xf32> -> vector<2x8x8xf32>
      "tpu.trace_stop"() : () -> ()
      %cst_77 = arith.constant 0.353553385 : f32
      %156 = vector.broadcast %cst_77 : f32 to vector<2x8x8xf32>
      %157 = arith.mulf %155, %156 : vector<2x8x8xf32>
      %cst_78 = arith.constant dense<0xFF800000> : vector<2x8xf32>
      %158 = vector.multi_reduction <maximumf>, %157, %cst_78 [2] : vector<2x8x8xf32> to vector<2x8xf32>
      %159 = vector.shape_cast %158 : vector<2x8xf32> to vector<2x8x1xf32>
      %160 = vector.broadcast %159 : vector<2x8x1xf32> to vector<2x8x8xf32>
      %161 = arith.subf %157, %160 : vector<2x8x8xf32>
      %162 = math.exp %161 : vector<2x8x8xf32>
      %cst_79 = arith.constant dense<0.000000e+00> : vector<2x8xf32>
      %163 = vector.multi_reduction <add>, %162, %cst_79 [2] : vector<2x8x8xf32> to vector<2x8xf32>
      %164 = vector.shape_cast %163 : vector<2x8xf32> to vector<2x8x1xf32>
      %165 = tpu.reciprocal %164 {approx = true} : vector<2x8x1xf32> -> vector<2x8x1xf32>
      %166 = vector.broadcast %165 : vector<2x8x1xf32> to vector<2x8x8xf32>
      %167 = arith.mulf %162, %166 : vector<2x8x8xf32>
      %168 = arith.truncf %167 : vector<2x8x8xf32> to vector<2x8x8xbf16>
      "tpu.trace_start"() <{level = 10 : i32, message = "bqk,bkd->bqd"}> : () -> ()
      %cst_80 = arith.constant dense<0.000000e+00> : vector<2x8x8xf32>
      %169 = tpu.matmul %168, %154, %cst_80 {dimension_numbers = #tpu.dot_dimension_numbers<[2], [1], [1], [2], [0, 0, 0, 1, 1, 2], [0], [0]>} : vector<2x8x8xbf16>, vector<2x8x8xbf16>, vector<2x8x8xf32> -> vector<2x8x8xf32>
      "tpu.trace_stop"() : () -> ()
      %170 = vector.shape_cast %169 : vector<2x8x8xf32> to vector<16x8xf32>
      %171 = vector.extract_strided_slice %95 {offsets = [0, 24], sizes = [16, 8], strides = [1, 1]} : vector<16x120xf32> to vector<16x8xf32>
      %172 = vector.extract_strided_slice %95 {offsets = [0, 64], sizes = [16, 8], strides = [1, 1]} : vector<16x120xf32> to vector<16x8xf32>
      %173 = vector.extract_strided_slice %95 {offsets = [0, 104], sizes = [16, 8], strides = [1, 1]} : vector<16x120xf32> to vector<16x8xf32>
      %174 = vector.shape_cast %171 : vector<16x8xf32> to vector<2x8x8xf32>
      %175 = arith.truncf %174 : vector<2x8x8xf32> to vector<2x8x8xbf16>
      %176 = vector.shape_cast %172 : vector<16x8xf32> to vector<2x8x8xf32>
      %177 = arith.truncf %176 : vector<2x8x8xf32> to vector<2x8x8xbf16>
      %178 = vector.shape_cast %173 : vector<16x8xf32> to vector<2x8x8xf32>
      %179 = arith.truncf %178 : vector<2x8x8xf32> to vector<2x8x8xbf16>
      "tpu.trace_start"() <{level = 10 : i32, message = "bqd,bkd->bqk"}> : () -> ()
      %cst_81 = arith.constant dense<0.000000e+00> : vector<2x8x8xf32>
      %180 = tpu.matmul %175, %177, %cst_81 {dimension_numbers = #tpu.dot_dimension_numbers<[2], [2], [1], [1], [0, 0, 0, 1, 1, 1], [0], [0]>} : vector<2x8x8xbf16>, vector<2x8x8xbf16>, vector<2x8x8xf32> -> vector<2x8x8xf32>
      "tpu.trace_stop"() : () -> ()
      %cst_82 = arith.constant 0.353553385 : f32
      %181 = vector.broadcast %cst_82 : f32 to vector<2x8x8xf32>
      %182 = arith.mulf %180, %181 : vector<2x8x8xf32>
      %cst_83 = arith.constant dense<0xFF800000> : vector<2x8xf32>
      %183 = vector.multi_reduction <maximumf>, %182, %cst_83 [2] : vector<2x8x8xf32> to vector<2x8xf32>
      %184 = vector.shape_cast %183 : vector<2x8xf32> to vector<2x8x1xf32>
      %185 = vector.broadcast %184 : vector<2x8x1xf32> to vector<2x8x8xf32>
      %186 = arith.subf %182, %185 : vector<2x8x8xf32>
      %187 = math.exp %186 : vector<2x8x8xf32>
      %cst_84 = arith.constant dense<0.000000e+00> : vector<2x8xf32>
      %188 = vector.multi_reduction <add>, %187, %cst_84 [2] : vector<2x8x8xf32> to vector<2x8xf32>
      %189 = vector.shape_cast %188 : vector<2x8xf32> to vector<2x8x1xf32>
      %190 = tpu.reciprocal %189 {approx = true} : vector<2x8x1xf32> -> vector<2x8x1xf32>
      %191 = vector.broadcast %190 : vector<2x8x1xf32> to vector<2x8x8xf32>
      %192 = arith.mulf %187, %191 : vector<2x8x8xf32>
      %193 = arith.truncf %192 : vector<2x8x8xf32> to vector<2x8x8xbf16>
      "tpu.trace_start"() <{level = 10 : i32, message = "bqk,bkd->bqd"}> : () -> ()
      %cst_85 = arith.constant dense<0.000000e+00> : vector<2x8x8xf32>
      %194 = tpu.matmul %193, %179, %cst_85 {dimension_numbers = #tpu.dot_dimension_numbers<[2], [1], [1], [2], [0, 0, 0, 1, 1, 2], [0], [0]>} : vector<2x8x8xbf16>, vector<2x8x8xbf16>, vector<2x8x8xf32> -> vector<2x8x8xf32>
      "tpu.trace_stop"() : () -> ()
      %195 = vector.shape_cast %194 : vector<2x8x8xf32> to vector<16x8xf32>
      %196 = vector.extract_strided_slice %95 {offsets = [0, 32], sizes = [16, 8], strides = [1, 1]} : vector<16x120xf32> to vector<16x8xf32>
      %197 = vector.extract_strided_slice %95 {offsets = [0, 72], sizes = [16, 8], strides = [1, 1]} : vector<16x120xf32> to vector<16x8xf32>
      %198 = vector.extract_strided_slice %95 {offsets = [0, 112], sizes = [16, 8], strides = [1, 1]} : vector<16x120xf32> to vector<16x8xf32>
      %199 = vector.shape_cast %196 : vector<16x8xf32> to vector<2x8x8xf32>
      %200 = arith.truncf %199 : vector<2x8x8xf32> to vector<2x8x8xbf16>
      %201 = vector.shape_cast %197 : vector<16x8xf32> to vector<2x8x8xf32>
      %202 = arith.truncf %201 : vector<2x8x8xf32> to vector<2x8x8xbf16>
      %203 = vector.shape_cast %198 : vector<16x8xf32> to vector<2x8x8xf32>
      %204 = arith.truncf %203 : vector<2x8x8xf32> to vector<2x8x8xbf16>
      "tpu.trace_start"() <{level = 10 : i32, message = "bqd,bkd->bqk"}> : () -> ()
      %cst_86 = arith.constant dense<0.000000e+00> : vector<2x8x8xf32>
      %205 = tpu.matmul %200, %202, %cst_86 {dimension_numbers = #tpu.dot_dimension_numbers<[2], [2], [1], [1], [0, 0, 0, 1, 1, 1], [0], [0]>} : vector<2x8x8xbf16>, vector<2x8x8xbf16>, vector<2x8x8xf32> -> vector<2x8x8xf32>
      "tpu.trace_stop"() : () -> ()
      %cst_87 = arith.constant 0.353553385 : f32
      %206 = vector.broadcast %cst_87 : f32 to vector<2x8x8xf32>
      %207 = arith.mulf %205, %206 : vector<2x8x8xf32>
      %cst_88 = arith.constant dense<0xFF800000> : vector<2x8xf32>
      %208 = vector.multi_reduction <maximumf>, %207, %cst_88 [2] : vector<2x8x8xf32> to vector<2x8xf32>
      %209 = vector.shape_cast %208 : vector<2x8xf32> to vector<2x8x1xf32>
      %210 = vector.broadcast %209 : vector<2x8x1xf32> to vector<2x8x8xf32>
      %211 = arith.subf %207, %210 : vector<2x8x8xf32>
      %212 = math.exp %211 : vector<2x8x8xf32>
      %cst_89 = arith.constant dense<0.000000e+00> : vector<2x8xf32>
      %213 = vector.multi_reduction <add>, %212, %cst_89 [2] : vector<2x8x8xf32> to vector<2x8xf32>
      %214 = vector.shape_cast %213 : vector<2x8xf32> to vector<2x8x1xf32>
      %215 = tpu.reciprocal %214 {approx = true} : vector<2x8x1xf32> -> vector<2x8x1xf32>
      %216 = vector.broadcast %215 : vector<2x8x1xf32> to vector<2x8x8xf32>
      %217 = arith.mulf %212, %216 : vector<2x8x8xf32>
      %218 = arith.truncf %217 : vector<2x8x8xf32> to vector<2x8x8xbf16>
      "tpu.trace_start"() <{level = 10 : i32, message = "bqk,bkd->bqd"}> : () -> ()
      %cst_90 = arith.constant dense<0.000000e+00> : vector<2x8x8xf32>
      %219 = tpu.matmul %218, %204, %cst_90 {dimension_numbers = #tpu.dot_dimension_numbers<[2], [1], [1], [2], [0, 0, 0, 1, 1, 2], [0], [0]>} : vector<2x8x8xbf16>, vector<2x8x8xbf16>, vector<2x8x8xf32> -> vector<2x8x8xf32>
      "tpu.trace_stop"() : () -> ()
      %220 = vector.shape_cast %219 : vector<2x8x8xf32> to vector<16x8xf32>
      %221 = tpu.concatenate %120, %145, %170, %195, %220 in 1 : vector<16x8xf32>, vector<16x8xf32>, vector<16x8xf32>, vector<16x8xf32>, vector<16x8xf32> -> vector<16x40xf32>
      %222 = arith.truncf %221 : vector<16x40xf32> to vector<16x40xbf16>
      %223 = arith.index_cast %arg21 : i32 to index
      %c0_91 = arith.constant 0 : index
      %c0_92 = arith.constant 0 : index
      %224 = vector.load %arg5[%223, %c0_91, %c0_92] : memref<10x40x40xbf16, #tpu.memory_space<vmem>>, vector<1x40x40xbf16>
      %225 = vector.shape_cast %224 : vector<1x40x40xbf16> to vector<40x40xbf16>
      %cst_93 = arith.constant dense<0.000000e+00> : vector<16x40xf32>
      %226 = tpu.matmul %222, %225, %cst_93 {dimension_numbers = #tpu.dot_dimension_numbers<[1], [0], [0], [1], [0, 0, 1, 1], [], []>} : vector<16x40xbf16>, vector<40x40xbf16>, vector<16x40xf32> -> vector<16x40xf32>
      %227 = arith.index_cast %arg21 : i32 to index
      %c0_94 = arith.constant 0 : index
      %c0_95 = arith.constant 0 : index
      %228 = vector.load %arg6[%227, %c0_94, %c0_95] : memref<10x1x40xf32, #tpu.memory_space<vmem>>, vector<1x1x40xf32>
      %229 = vector.shape_cast %228 : vector<1x1x40xf32> to vector<1x40xf32>
      %230 = vector.broadcast %229 : vector<1x40xf32> to vector<16x40xf32>
      %231 = arith.addf %226, %230 : vector<16x40xf32>
      %232 = arith.addf %arg22, %231 : vector<16x40xf32>
      %233 = arith.index_cast %arg21 : i32 to index
      %c0_96 = arith.constant 0 : index
      %c0_97 = arith.constant 0 : index
      %234 = vector.load %arg7[%233, %c0_96, %c0_97] : memref<10x1x40xf32, #tpu.memory_space<vmem>>, vector<1x1x40xf32>
      %235 = vector.shape_cast %234 : vector<1x1x40xf32> to vector<1x40xf32>
      %236 = arith.index_cast %arg21 : i32 to index
      %c0_98 = arith.constant 0 : index
      %c0_99 = arith.constant 0 : index
      %237 = vector.load %arg8[%236, %c0_98, %c0_99] : memref<10x1x40xf32, #tpu.memory_space<vmem>>, vector<1x1x40xf32>
      %238 = vector.shape_cast %237 : vector<1x1x40xf32> to vector<1x40xf32>
      %cst_100 = arith.constant dense<0.000000e+00> : vector<16xf32>
      %239 = vector.multi_reduction <add>, %232, %cst_100 [1] : vector<16x40xf32> to vector<16xf32>
      %240 = vector.shape_cast %239 : vector<16xf32> to vector<16x1xf32>
      %cst_101 = arith.constant 4.000000e+01 : f32
      %241 = vector.broadcast %cst_101 : f32 to vector<16x1xf32>
      %242 = arith.divf %240, %241 : vector<16x1xf32>
      %243 = vector.broadcast %242 : vector<16x1xf32> to vector<16x40xf32>
      %244 = arith.subf %232, %243 : vector<16x40xf32>
      %245 = arith.mulf %244, %244 : vector<16x40xf32>
      %cst_102 = arith.constant dense<0.000000e+00> : vector<16xf32>
      %246 = vector.multi_reduction <add>, %245, %cst_102 [1] : vector<16x40xf32> to vector<16xf32>
      %247 = vector.shape_cast %246 : vector<16xf32> to vector<16x1xf32>
      %cst_103 = arith.constant 4.000000e+01 : f32
      %248 = vector.broadcast %cst_103 : f32 to vector<16x1xf32>
      %249 = arith.divf %247, %248 : vector<16x1xf32>
      %250 = vector.broadcast %242 : vector<16x1xf32> to vector<16x40xf32>
      %251 = arith.subf %232, %250 : vector<16x40xf32>
      %cst_104 = arith.constant 9.99999974E-6 : f32
      %252 = vector.broadcast %cst_104 : f32 to vector<16x1xf32>
      %253 = arith.addf %249, %252 : vector<16x1xf32>
      %254 = math.rsqrt %253 : vector<16x1xf32>
      %255 = vector.broadcast %254 : vector<16x1xf32> to vector<16x40xf32>
      %256 = arith.mulf %251, %255 : vector<16x40xf32>
      %257 = vector.broadcast %235 : vector<1x40xf32> to vector<16x40xf32>
      %258 = arith.mulf %256, %257 : vector<16x40xf32>
      %259 = vector.broadcast %238 : vector<1x40xf32> to vector<16x40xf32>
      %260 = arith.addf %258, %259 : vector<16x40xf32>
      %261 = arith.truncf %260 : vector<16x40xf32> to vector<16x40xbf16>
      %262 = arith.index_cast %arg21 : i32 to index
      %c0_105 = arith.constant 0 : index
      %c0_106 = arith.constant 0 : index
      %263 = vector.load %arg11[%262, %c0_105, %c0_106] : memref<10x40x1024xbf16, #tpu.memory_space<vmem>>, vector<1x40x1024xbf16>
      %264 = vector.shape_cast %263 : vector<1x40x1024xbf16> to vector<40x1024xbf16>
      %cst_107 = arith.constant dense<0.000000e+00> : vector<16x1024xf32>
      %265 = tpu.matmul %261, %264, %cst_107 {dimension_numbers = #tpu.dot_dimension_numbers<[1], [0], [0], [1], [0, 0, 1, 1], [], []>} : vector<16x40xbf16>, vector<40x1024xbf16>, vector<16x1024xf32> -> vector<16x1024xf32>
      %266 = arith.index_cast %arg21 : i32 to index
      %c0_108 = arith.constant 0 : index
      %c0_109 = arith.constant 0 : index
      %267 = vector.load %arg12[%266, %c0_108, %c0_109] : memref<10x1x1024xf32, #tpu.memory_space<vmem>>, vector<1x1x1024xf32>
      %268 = vector.shape_cast %267 : vector<1x1x1024xf32> to vector<1x1024xf32>
      %269 = vector.broadcast %268 : vector<1x1024xf32> to vector<16x1024xf32>
      %270 = arith.addf %265, %269 : vector<16x1024xf32>
      %cst_110 = arith.constant 0.000000e+00 : f32
      %271 = vector.broadcast %cst_110 : f32 to vector<16x1024xf32>
      %272 = arith.maximumf %270, %271 : vector<16x1024xf32>
      %273 = arith.truncf %272 : vector<16x1024xf32> to vector<16x1024xbf16>
      %274 = arith.index_cast %arg21 : i32 to index
      %c0_111 = arith.constant 0 : index
      %c0_112 = arith.constant 0 : index
      %275 = vector.load %arg13[%274, %c0_111, %c0_112] : memref<10x1024x40xbf16, #tpu.memory_space<vmem>>, vector<1x1024x40xbf16>
      %276 = vector.shape_cast %275 : vector<1x1024x40xbf16> to vector<1024x40xbf16>
      %cst_113 = arith.constant dense<0.000000e+00> : vector<16x40xf32>
      %277 = tpu.matmul %273, %276, %cst_113 {dimension_numbers = #tpu.dot_dimension_numbers<[1], [0], [0], [1], [0, 0, 1, 1], [], []>} : vector<16x1024xbf16>, vector<1024x40xbf16>, vector<16x40xf32> -> vector<16x40xf32>
      %278 = arith.index_cast %arg21 : i32 to index
      %c0_114 = arith.constant 0 : index
      %c0_115 = arith.constant 0 : index
      %279 = vector.load %arg14[%278, %c0_114, %c0_115] : memref<10x1x40xf32, #tpu.memory_space<vmem>>, vector<1x1x40xf32>
      %280 = vector.shape_cast %279 : vector<1x1x40xf32> to vector<1x40xf32>
      %281 = vector.broadcast %280 : vector<1x40xf32> to vector<16x40xf32>
      %282 = arith.addf %277, %281 : vector<16x40xf32>
      %283 = arith.addf %260, %282 : vector<16x40xf32>
      %284 = arith.index_cast %arg21 : i32 to index
      %c0_116 = arith.constant 0 : index
      %c0_117 = arith.constant 0 : index
      %285 = vector.load %arg9[%284, %c0_116, %c0_117] : memref<10x1x40xf32, #tpu.memory_space<vmem>>, vector<1x1x40xf32>
      %286 = vector.shape_cast %285 : vector<1x1x40xf32> to vector<1x40xf32>
      %287 = arith.index_cast %arg21 : i32 to index
      %c0_118 = arith.constant 0 : index
      %c0_119 = arith.constant 0 : index
      %288 = vector.load %arg10[%287, %c0_118, %c0_119] : memref<10x1x40xf32, #tpu.memory_space<vmem>>, vector<1x1x40xf32>
      %289 = vector.shape_cast %288 : vector<1x1x40xf32> to vector<1x40xf32>
      %cst_120 = arith.constant dense<0.000000e+00> : vector<16xf32>
      %290 = vector.multi_reduction <add>, %283, %cst_120 [1] : vector<16x40xf32> to vector<16xf32>
      %291 = vector.shape_cast %290 : vector<16xf32> to vector<16x1xf32>
      %cst_121 = arith.constant 4.000000e+01 : f32
      %292 = vector.broadcast %cst_121 : f32 to vector<16x1xf32>
      %293 = arith.divf %291, %292 : vector<16x1xf32>
      %294 = vector.broadcast %293 : vector<16x1xf32> to vector<16x40xf32>
      %295 = arith.subf %283, %294 : vector<16x40xf32>
      %296 = arith.mulf %295, %295 : vector<16x40xf32>
      %cst_122 = arith.constant dense<0.000000e+00> : vector<16xf32>
      %297 = vector.multi_reduction <add>, %296, %cst_122 [1] : vector<16x40xf32> to vector<16xf32>
      %298 = vector.shape_cast %297 : vector<16xf32> to vector<16x1xf32>
      %cst_123 = arith.constant 4.000000e+01 : f32
      %299 = vector.broadcast %cst_123 : f32 to vector<16x1xf32>
      %300 = arith.divf %298, %299 : vector<16x1xf32>
      %301 = vector.broadcast %293 : vector<16x1xf32> to vector<16x40xf32>
      %302 = arith.subf %283, %301 : vector<16x40xf32>
      %cst_124 = arith.constant 9.99999974E-6 : f32
      %303 = vector.broadcast %cst_124 : f32 to vector<16x1xf32>
      %304 = arith.addf %300, %303 : vector<16x1xf32>
      %305 = math.rsqrt %304 : vector<16x1xf32>
      %306 = vector.broadcast %305 : vector<16x1xf32> to vector<16x40xf32>
      %307 = arith.mulf %302, %306 : vector<16x40xf32>
      %308 = vector.broadcast %286 : vector<1x40xf32> to vector<16x40xf32>
      %309 = arith.mulf %307, %308 : vector<16x40xf32>
      %310 = vector.broadcast %289 : vector<1x40xf32> to vector<16x40xf32>
      %311 = arith.addf %309, %310 : vector<16x40xf32>
      scf.yield %311 : vector<16x40xf32>
    }
    %c10_i32_42 = arith.constant 10 : i32
    %55 = vector.extract_strided_slice %54 {offsets = [0, 0], sizes = [8, 40], strides = [1, 1]} : vector<16x40xf32> to vector<8x40xf32>
    %56 = vector.extract_strided_slice %54 {offsets = [0, 0], sizes = [8, 40], strides = [1, 1]} : vector<16x40xf32> to vector<8x40xf32>
    %57 = vector.extract_strided_slice %54 {offsets = [8, 0], sizes = [8, 40], strides = [1, 1]} : vector<16x40xf32> to vector<8x40xf32>
    %58 = arith.maximumf %55, %57 : vector<8x40xf32>
    %59 = arith.addf %56, %57 : vector<8x40xf32>
    %cst_43 = arith.constant 5.000000e-01 : f32
    %60 = vector.broadcast %cst_43 : f32 to vector<8x40xf32>
    %61 = arith.mulf %59, %60 : vector<8x40xf32>
    %62 = arith.truncf %58 : vector<8x40xf32> to vector<8x40xbf16>
    %c0_44 = arith.constant 0 : index
    %c0_45 = arith.constant 0 : index
    %63 = vector.load %arg15[%c0_44, %c0_45] : memref<40x80xbf16, #tpu.memory_space<vmem>>, vector<40x80xbf16>
    %cst_46 = arith.constant dense<0.000000e+00> : vector<8x80xf32>
    %64 = tpu.matmul %62, %63, %cst_46 {dimension_numbers = #tpu.dot_dimension_numbers<[1], [0], [0], [1], [0, 0, 1, 1], [], []>} : vector<8x40xbf16>, vector<40x80xbf16>, vector<8x80xf32> -> vector<8x80xf32>
    %65 = arith.truncf %61 : vector<8x40xf32> to vector<8x40xbf16>
    %c0_47 = arith.constant 0 : index
    %c0_48 = arith.constant 0 : index
    %66 = vector.load %arg16[%c0_47, %c0_48] : memref<40x80xbf16, #tpu.memory_space<vmem>>, vector<40x80xbf16>
    %cst_49 = arith.constant dense<0.000000e+00> : vector<8x80xf32>
    %67 = tpu.matmul %65, %66, %cst_49 {dimension_numbers = #tpu.dot_dimension_numbers<[1], [0], [0], [1], [0, 0, 1, 1], [], []>} : vector<8x40xbf16>, vector<40x80xbf16>, vector<8x80xf32> -> vector<8x80xf32>
    %68 = arith.addf %64, %67 : vector<8x80xf32>
    %c0_50 = arith.constant 0 : index
    %c0_51 = arith.constant 0 : index
    %69 = vector.load %arg17[%c0_50, %c0_51] : memref<1x80xf32, #tpu.memory_space<vmem>>, vector<1x80xf32>
    %70 = vector.broadcast %69 : vector<1x80xf32> to vector<8x80xf32>
    %71 = arith.addf %68, %70 : vector<8x80xf32>
    %cst_52 = arith.constant 0.000000e+00 : f32
    %72 = vector.broadcast %cst_52 : f32 to vector<8x80xf32>
    %73 = arith.maximumf %71, %72 : vector<8x80xf32>
    %74 = arith.truncf %73 : vector<8x80xf32> to vector<8x80xbf16>
    %c0_53 = arith.constant 0 : index
    %c0_54 = arith.constant 0 : index
    %75 = vector.load %arg18[%c0_53, %c0_54] : memref<80x128xbf16, #tpu.memory_space<vmem>>, vector<80x128xbf16>
    %cst_55 = arith.constant dense<0.000000e+00> : vector<8x128xf32>
    %76 = tpu.matmul %74, %75, %cst_55 {dimension_numbers = #tpu.dot_dimension_numbers<[1], [0], [0], [1], [0, 0, 1, 1], [], []>} : vector<8x80xbf16>, vector<80x128xbf16>, vector<8x128xf32> -> vector<8x128xf32>
    %c0_56 = arith.constant 0 : index
    %c0_57 = arith.constant 0 : index
    %77 = vector.load %arg19[%c0_56, %c0_57] : memref<1x128xf32, #tpu.memory_space<vmem>>, vector<1x128xf32>
    %78 = vector.broadcast %77 : vector<1x128xf32> to vector<8x128xf32>
    %79 = arith.addf %76, %78 : vector<8x128xf32>
    %80 = arith.negf %79 : vector<8x128xf32>
    %81 = math.exp %80 : vector<8x128xf32>
    %cst_58 = arith.constant 1.000000e+00 : f32
    %82 = vector.broadcast %cst_58 : f32 to vector<8x128xf32>
    %83 = arith.addf %82, %81 : vector<8x128xf32>
    %84 = arith.divf %82, %83 : vector<8x128xf32>
    %c0_59 = arith.constant 0 : index
    %c0_60 = arith.constant 0 : index
    %85 = vector.load %arg20[%c0_59, %c0_60] : memref<8x128xf32, #tpu.memory_space<vmem>>, vector<8x128xf32>
    tpu.vector_store %arg20[%c0_59, %c0_60], %84 {strides = array<i32>} : memref<8x128xf32, #tpu.memory_space<vmem>>, vector<8x128xf32>,
    return
  }
}

</mosaic_0001>

<llo_original>
// kernel: neural_net_forward.1
$region0: #{neural_net_forward.1}
  #allocation0 [shape = 'u32[]', space=smem, size = 0x4, offset = 0x4, fixed_abs, tag = 'smem constant byte address 0x4 - core index']
  #allocation1 [shape = 'u32[72,128]{1,0:T(1,128)}', space=vmem, size = 0x9000, scoped, tag = 'internal scratch']
  %s0 = inlined_call_operand.vmem [shape: s32[8,2], index: 0, kind: input, shape index: {}]
  %s1 = inlined_call_operand.vmem [shape: f32[100,40], index: 1, kind: input, shape index: {}]
  %s2 = inlined_call_operand.vmem [shape: f32[16,40], index: 2, kind: input, shape index: {}]
  %s3 = inlined_call_operand.vmem [shape: bf16[10,40,120], index: 3, kind: input, shape index: {}]
  %s4 = inlined_call_operand.vmem [shape: f32[10,1,120], index: 4, kind: input, shape index: {}]
  %s5 = inlined_call_operand.vmem [shape: bf16[10,40,40], index: 5, kind: input, shape index: {}]
  %s6 = inlined_call_operand.vmem [shape: f32[10,1,40], index: 6, kind: input, shape index: {}]
  %s7 = inlined_call_operand.vmem [shape: f32[10,1,40], index: 7, kind: input, shape index: {}]
  %s8 = inlined_call_operand.vmem [shape: f32[10,1,40], index: 8, kind: input, shape index: {}]
  %s9 = inlined_call_operand.vmem [shape: f32[10,1,40], index: 9, kind: input, shape index: {}]
  %s10 = inlined_call_operand.vmem [shape: f32[10,1,40], index: 10, kind: input, shape index: {}]
  %s11 = inlined_call_operand.vmem [shape: bf16[10,40,1024], index: 11, kind: input, shape index: {}]
  %s12 = inlined_call_operand.vmem [shape: f32[10,1,1024], index: 12, kind: input, shape index: {}]
  %s13 = inlined_call_operand.vmem [shape: bf16[10,1024,40], index: 13, kind: input, shape index: {}]
  %s14 = inlined_call_operand.vmem [shape: f32[10,1,40], index: 14, kind: input, shape index: {}]
  %s15 = inlined_call_operand.vmem [shape: bf16[40,80], index: 15, kind: input, shape index: {}]
  %s16 = inlined_call_operand.vmem [shape: bf16[40,80], index: 16, kind: input, shape index: {}]
  %s17 = inlined_call_operand.vmem [shape: f32[1,80], index: 17, kind: input, shape index: {}]
  %s18 = inlined_call_operand.vmem [shape: bf16[80,128], index: 18, kind: input, shape index: {}]
  %s19 = inlined_call_operand.vmem [shape: f32[1,128], index: 19, kind: input, shape index: {}]
  %s20 = inlined_call_operand.vmem [shape: f32[8,128], index: 20, kind: output, shape index: {}]
  %s21 = sld [smem:[#allocation0]]
  $region101: #{neural_net_forward.1} parent=0
    _
  %s23 = ssub.s32 1, %s21
  %s24 = scalar_select 0, %s23, %s21
  $region1: #{neural_net_forward.1} parent=0
    #allocation2 [shape = 'u8[4096]{0}', space=smem, size = 0x1000, scoped, tag = 'input window, operand 0, single buffered']
    #allocation3 [shape = 's32[1]{0}', space=sflag, size = 0x4, scoped, tag = 'scoped memory for neural_net_forward.1']
    %25 = vsyncpa [#allocation3], 0
    // Predicated region
    $region2: #{neural_net_forward.1} parent=1 // pred_check
      _
    $region3: #{neural_net_forward.1} parent=1 // pred_check_branch
      %27 = sbr.rel (0) target = $region5
    $region4: #{neural_net_forward.1} parent=1 // pred_region
      %29 = vsyncadd [#allocation3], 0
      %s31 = sshll.u32 %s0, 4
      %s32 = int_to_ptr.vmem [resolvable:$true] %s31
      %34 = dma.vmem_to_smem %s32, 128, [#allocation2], [#allocation3]
    $region5: #{neural_net_forward.1} parent=1 // pred_fallthru
      _
    // Predicated region
    $region6: #{neural_net_forward.1} parent=1 // pred_check
      _
    $region7: #{neural_net_forward.1} parent=1 // pred_check_branch
      %36 = sbr.rel (0) target = $region9
    $region8: #{neural_net_forward.1} parent=1 // pred_region
      _
    $region9: #{neural_net_forward.1} parent=1 // pred_fallthru
      _
    // Predicated region
    $region10: #{neural_net_forward.1} parent=1 // pred_check
      _
    $region11: #{neural_net_forward.1} parent=1 // pred_check_branch
      %38 = sbr.rel (0) target = $region13
    $region12: #{neural_net_forward.1} parent=1 // pred_region
      _
    $region13: #{neural_net_forward.1} parent=1 // pred_fallthru
      _
    // Predicated region
    $region14: #{neural_net_forward.1} parent=1 // pred_check
      _
    $region15: #{neural_net_forward.1} parent=1 // pred_check_branch
      %40 = sbr.rel (0) target = $region17
    $region16: #{neural_net_forward.1} parent=1 // pred_region
      _
    $region17: #{neural_net_forward.1} parent=1 // pred_fallthru
      _
    // Predicated region
    $region18: #{neural_net_forward.1} parent=1 // pred_check
      _
    $region19: #{neural_net_forward.1} parent=1 // pred_check_branch
      %42 = sbr.rel (0) target = $region21
    $region20: #{neural_net_forward.1} parent=1 // pred_region
      _
    $region21: #{neural_net_forward.1} parent=1 // pred_fallthru
      _
    // Predicated region
    $region22: #{neural_net_forward.1} parent=1 // pred_check
      _
    $region23: #{neural_net_forward.1} parent=1 // pred_check_branch
      %44 = sbr.rel (0) target = $region25
    $region24: #{neural_net_forward.1} parent=1 // pred_region
      _
    $region25: #{neural_net_forward.1} parent=1 // pred_fallthru
      _
    // Predicated region
    $region26: #{neural_net_forward.1} parent=1 // pred_check
      _
    $region27: #{neural_net_forward.1} parent=1 // pred_check_branch
      %46 = sbr.rel (0) target = $region29
    $region28: #{neural_net_forward.1} parent=1 // pred_region
      _
    $region29: #{neural_net_forward.1} parent=1 // pred_fallthru
      _
    // Predicated region
    $region30: #{neural_net_forward.1} parent=1 // pred_check
      _
    $region31: #{neural_net_forward.1} parent=1 // pred_check_branch
      %48 = sbr.rel (0) target = $region33
    $region32: #{neural_net_forward.1} parent=1 // pred_region
      _
    $region33: #{neural_net_forward.1} parent=1 // pred_fallthru
      _
    // Predicated region
    $region34: #{neural_net_forward.1} parent=1 // pred_check
      _
    $region35: #{neural_net_forward.1} parent=1 // pred_check_branch
      %50 = sbr.rel (0) target = $region37
    $region36: #{neural_net_forward.1} parent=1 // pred_region
      _
    $region37: #{neural_net_forward.1} parent=1 // pred_fallthru
      _
    // Predicated region
    $region38: #{neural_net_forward.1} parent=1 // pred_check
      _
    $region39: #{neural_net_forward.1} parent=1 // pred_check_branch
      %52 = sbr.rel (0) target = $region41
    $region40: #{neural_net_forward.1} parent=1 // pred_region
      _
    $region41: #{neural_net_forward.1} parent=1 // pred_fallthru
      _
    // Predicated region
    $region42: #{neural_net_forward.1} parent=1 // pred_check
      _
    $region43: #{neural_net_forward.1} parent=1 // pred_check_branch
      %54 = sbr.rel (0) target = $region45
    $region44: #{neural_net_forward.1} parent=1 // pred_region
      _
    $region45: #{neural_net_forward.1} parent=1 // pred_fallthru
      _
    // Predicated region
    $region46: #{neural_net_forward.1} parent=1 // pred_check
      _
    $region47: #{neural_net_forward.1} parent=1 // pred_check_branch
      %56 = sbr.rel (0) target = $region49
    $region48: #{neural_net_forward.1} parent=1 // pred_region
      _
    $region49: #{neural_net_forward.1} parent=1 // pred_fallthru
      _
    // Predicated region
    $region50: #{neural_net_forward.1} parent=1 // pred_check
      _
    $region51: #{neural_net_forward.1} parent=1 // pred_check_branch
      %58 = sbr.rel (0) target = $region53
    $region52: #{neural_net_forward.1} parent=1 // pred_region
      _
    $region53: #{neural_net_forward.1} parent=1 // pred_fallthru
      _
    // Predicated region
    $region54: #{neural_net_forward.1} parent=1 // pred_check
      _
    $region55: #{neural_net_forward.1} parent=1 // pred_check_branch
      %60 = sbr.rel (0) target = $region57
    $region56: #{neural_net_forward.1} parent=1 // pred_region
      _
    $region57: #{neural_net_forward.1} parent=1 // pred_fallthru
      _
    // Predicated region
    $region58: #{neural_net_forward.1} parent=1 // pred_check
      _
    $region59: #{neural_net_forward.1} parent=1 // pred_check_branch
      %62 = sbr.rel (0) target = $region61
    $region60: #{neural_net_forward.1} parent=1 // pred_region
      _
    $region61: #{neural_net_forward.1} parent=1 // pred_fallthru
      _
    // Predicated region
    $region62: #{neural_net_forward.1} parent=1 // pred_check
      _
    $region63: #{neural_net_forward.1} parent=1 // pred_check_branch
      %64 = sbr.rel (0) target = $region65
    $region64: #{neural_net_forward.1} parent=1 // pred_region
      _
    $region65: #{neural_net_forward.1} parent=1 // pred_fallthru
      _
    // Predicated region
    $region66: #{neural_net_forward.1} parent=1 // pred_check
      _
    $region67: #{neural_net_forward.1} parent=1 // pred_check_branch
      %66 = sbr.rel (0) target = $region69
    $region68: #{neural_net_forward.1} parent=1 // pred_region
      _
    $region69: #{neural_net_forward.1} parent=1 // pred_fallthru
      _
    // Predicated region
    $region70: #{neural_net_forward.1} parent=1 // pred_check
      _
    $region71: #{neural_net_forward.1} parent=1 // pred_check_branch
      %68 = sbr.rel (0) target = $region73
    $region72: #{neural_net_forward.1} parent=1 // pred_region
      _
    $region73: #{neural_net_forward.1} parent=1 // pred_fallthru
      _
    // Predicated region
    $region74: #{neural_net_forward.1} parent=1 // pred_check
      _
    $region75: #{neural_net_forward.1} parent=1 // pred_check_branch
      %70 = sbr.rel (0) target = $region77
    $region76: #{neural_net_forward.1} parent=1 // pred_region
      _
    $region77: #{neural_net_forward.1} parent=1 // pred_fallthru
      _
    // Predicated region
    $region78: #{neural_net_forward.1} parent=1 // pred_check
      _
    $region79: #{neural_net_forward.1} parent=1 // pred_check_branch
      %72 = sbr.rel (0) target = $region81
    $region80: #{neural_net_forward.1} parent=1 // pred_region
      _
    $region81: #{neural_net_forward.1} parent=1 // pred_fallthru
      _
    // Predicated region
    $region82: #{neural_net_forward.1} parent=1 // pred_check
      _
    $region83: #{neural_net_forward.1} parent=1 // pred_check_branch
      %74 = sbr.rel (0) target = $region85
    $region84: #{neural_net_forward.1} parent=1 // pred_region
      %76 = dma.done [#allocation3], 128
    $region85: #{neural_net_forward.1} parent=1 // pred_fallthru
      _
    %77 = sfence
    %s79 = sld [smem:[#allocation2]]
    %s80 = scalar_lea.vmem %s1, %s79
    %v81 = vld [vmem:[%s80] sm:$0x1]
    %s82 = sld [smem:[#allocation2 + $0x80]]
    %s83 = scalar_lea.vmem %s1, %s82
    %v84 = vld [vmem:[%s83] sm:$0x1]
    %s85 = sld [smem:[#allocation2 + $0x100]]
    %s86 = scalar_lea.vmem %s1, %s85
    %v87 = vld [vmem:[%s86] sm:$0x1]
    %s88 = sld [smem:[#allocation2 + $0x180]]
    %s89 = scalar_lea.vmem %s1, %s88
    %v90 = vld [vmem:[%s89] sm:$0x1]
    %s91 = sld [smem:[#allocation2 + $0x200]]
    %s92 = scalar_lea.vmem %s1, %s91
    %v93 = vld [vmem:[%s92] sm:$0x1]
    %s94 = sld [smem:[#allocation2 + $0x280]]
    %s95 = scalar_lea.vmem %s1, %s94
    %v96 = vld [vmem:[%s95] sm:$0x1]
    %s97 = sld [smem:[#allocation2 + $0x300]]
    %s98 = scalar_lea.vmem %s1, %s97
    %v99 = vld [vmem:[%s98] sm:$0x1]
    %s100 = sld [smem:[#allocation2 + $0x380]]
    %s101 = scalar_lea.vmem %s1, %s100
    %v102 = vld [vmem:[%s101] sm:$0x1]
    %s103 = sld [smem:[#allocation2 + $0x1]]
    %s104 = scalar_lea.vmem %s1, %s103
    %v105 = vld [vmem:[%s104] sm:$0x1]
    %s106 = sld [smem:[#allocation2 + $0x81]]
    %s107 = scalar_lea.vmem %s1, %s106
    %v108 = vld [vmem:[%s107] sm:$0x1]
    %s109 = sld [smem:[#allocation2 + $0x101]]
    %s110 = scalar_lea.vmem %s1, %s109
    %v111 = vld [vmem:[%s110] sm:$0x1]
    %s112 = sld [smem:[#allocation2 + $0x181]]
    %s113 = scalar_lea.vmem %s1, %s112
    %v114 = vld [vmem:[%s113] sm:$0x1]
    %s115 = sld [smem:[#allocation2 + $0x201]]
    %s116 = scalar_lea.vmem %s1, %s115
    %v117 = vld [vmem:[%s116] sm:$0x1]
    %s118 = sld [smem:[#allocation2 + $0x281]]
    %s119 = scalar_lea.vmem %s1, %s118
    %v120 = vld [vmem:[%s119] sm:$0x1]
    %s121 = sld [smem:[#allocation2 + $0x301]]
    %s122 = scalar_lea.vmem %s1, %s121
    %v123 = vld [vmem:[%s122] sm:$0x1]
    %s124 = sld [smem:[#allocation2 + $0x381]]
    %s125 = scalar_lea.vmem %s1, %s124
    %v126 = vld [vmem:[%s125] sm:$0x1]
    %v128 = vrot.slane %v84, 7
    %v131 = vrot.slane %v87, 6
    %v134 = vrot.slane %v90, 5
    %v137 = vrot.slane %v93, 4
    %v140 = vrot.slane %v96, 3
    %v143 = vrot.slane %v99, 2
    %v146 = vrot.slane %v102, 1
    %v149 = vrot.slane %v108, 7
    %v152 = vrot.slane %v111, 6
    %v155 = vrot.slane %v114, 5
    %v158 = vrot.slane %v117, 4
    %v161 = vrot.slane %v120, 3
    %v164 = vrot.slane %v123, 2
    %v167 = vrot.slane %v126, 1
    %vm169 = vcmask 1040384
    %v170 = vsel %vm169, %v81, %v128
    %vm171 = vcmask 1041408
    %v172 = vsel %vm171, %v170, %v131
    %vm173 = vcmask 1042432
    %v174 = vsel %vm173, %v172, %v134
    %vm175 = vcmask 1043456
    %v176 = vsel %vm175, %v174, %v137
    %vm177 = vcmask 1044480
    %v178 = vsel %vm177, %v176, %v140
    %vm179 = vcmask 1045504
    %v180 = vsel %vm179, %v178, %v143
    %vm181 = vcmask 1046528
    %v182 = vsel %vm181, %v180, %v146
    %v183 = vsel %vm169, %v105, %v149
    %v184 = vsel %vm171, %v183, %v152
    %v185 = vsel %vm173, %v184, %v155
    %v186 = vsel %vm175, %v185, %v158
    %v187 = vsel %vm177, %v186, %v161
    %v188 = vsel %vm179, %v187, %v164
    %v189 = vsel %vm181, %v188, %v167
    %v190 = vmul.f32 %v182, 6.3245554
    %v191 = vmul.f32 %v189, 6.3245554
    %v192 = vld [vmem:[%s2] sm:$0xff]
    %v193 = vld [vmem:[%s2 + $0x8] sm:$0xff]
    %v194 = vadd.f32 %v190, %v192
    %v195 = vadd.f32 %v191, %v193
    loop: start=0, step=1, limit=10
    $region86: #{neural_net_forward.1} parent=1 // loop_pre_header
      _
    $region87: #{neural_net_forward.1} parent=1 // loop_header
      %s197 = sphi 0, %s201
      %p198 = scmp.ge.s32.totalorder %s197, 10
      %v202 = vphi %v194, %v1984
      %v203 = vphi %v195, %v1985
    $region88: #{neural_net_forward.1} parent=1 // loop_header_branch
      %200 = sbr.rel (%p198) target = $region92
    $region89: #{neural_net_forward.1} parent=1 // loop_body
      %v204 = vpack.c.bf16 %v203, %v202
      %s205 = smul.u32 %s197, 5
      %s206 = smul.addr %s205, 4
      %s207 = scalar_lea.vmem %s3, %s206
      %v208 = vld [vmem:[%s207] sm:$0xf]
      %v209 = vld [vmem:[%s207 + $0x4] sm:$0xf]
      %v210 = vld [vmem:[%s207 + $0x8] sm:$0xf]
      %v211 = vld [vmem:[%s207 + $0xc] sm:$0xf]
      %v212 = vld [vmem:[%s207 + $0x10] sm:$0xf]
      %s213 = scalar_lea.vmem %s4, %s197
      %v214 = vld [vmem:[%s213] sm:$0x1]
      %v216 = vperm.slane %v214, 0
      %v223 = vunpack.c.l.b16 %v208
      %v224 = vunpack.c.l.b16 %v209
      %v225 = vunpack.c.l.b16 %v210
      %v226 = vunpack.c.l.b16 %v211
      %v227 = vunpack.c.l.b16 %v212
      %v228 = vpack.c.b16 %v224, %v223
      %v229 = vpack.c.b16 %v226, %v225
      %v230 = vpack.c.b16 %v227, %v227
      %vm233 = vcmask 326656
      %v235 = vsel %vm233, %v204, 0
      %v238 = vsel %vm175, %v230, 0
      %240 = vmatpush.bf16.msra.mxu0 0
      %241 = vmatpush.bf16.msra.mxu0 0
      %242 = vmatpush.bf16.msra.mxu0 0
      %243 = vmatpush.bf16.msra.mxu0 0
      %244 = vmatpush.bf16.msra.mxu0 0
      %245 = vmatpush.bf16.msra.mxu0 %v238
      %246 = vmatpush.bf16.msra.mxu0 %v229
      %247 = vmatpush.bf16.msra.mxu0 %v228
      %248 = vmatmul.bf16.gmra.mxu0 %v235
      %v249 = vpop.f32.mrf.mxu0
      %v250 = vadd.f32 %v216, %v249
      %v251 = vpop.f32.mrf.mxu0
      %v252 = vadd.f32 %v216, %v251
      %253 = vdwg.mxu0
      %v254 = vpack.c.bf16 %v250, %v250
      %v255 = vpack.c.bf16 %v252, %v252
      %v257 = vunpack.c.l.b16 %v254
      %v258 = vpack.c.b16 %v257, %v257
      %259 = vrot.lane.b32.xlu0 %v258, 88
      %v260 = vpop.permute.xlu0 %259
      %vm261 = vcmask 64512
      %v263 = vsel %vm261, %v254, 0
      %v266 = vsel %vm261, %v260, 0
      %268 = vmatpush.bf16.xpose.msra.mxu0 0
      %269 = vmatpush.bf16.xpose.msra.mxu0 0
      %270 = vmatpush.bf16.xpose.msra.mxu0 0
      %271 = vmatpush.bf16.xpose.msra.mxu0 0
      %272 = vmatpush.bf16.xpose.msra.mxu0 0
      %273 = vmatpush.bf16.xpose.msra.mxu0 0
      %274 = vmatpush.bf16.xpose.msra.mxu0 0
      %275 = vmatpush.bf16.xpose.msra.mxu0 %v266
      %276 = vmatmul.bf16.gmra.mxu0 %v263
      %v277 = vpop.f32.mrf.mxu0
      %v278 = vadd.f32 0.0, %v277
      %v279 = vpop.f32.mrf.mxu0
      %280 = vdwg.mxu0
      %v282 = vunpack.c.l.b16 %v255
      %v283 = vpack.c.b16 %v282, %v282
      %284 = vrot.lane.b32.xlu0 %v283, 88
      %v285 = vpop.permute.xlu0 %284
      %v287 = vsel %vm261, %v255, 0
      %v290 = vsel %vm261, %v285, 0
      %292 = vmatpush.bf16.xpose.msra.mxu0 0
      %293 = vmatpush.bf16.xpose.msra.mxu0 0
      %294 = vmatpush.bf16.xpose.msra.mxu0 0
      %295 = vmatpush.bf16.xpose.msra.mxu0 0
      %296 = vmatpush.bf16.xpose.msra.mxu0 0
      %297 = vmatpush.bf16.xpose.msra.mxu0 0
      %298 = vmatpush.bf16.xpose.msra.mxu0 0
      %299 = vmatpush.bf16.xpose.msra.mxu0 %v290
      %300 = vmatmul.bf16.gmra.mxu0 %v287
      %v301 = vpop.f32.mrf.mxu0
      %v302 = vadd.f32 0.0, %v301
      %v303 = vpop.f32.mrf.mxu0
      %304 = vdwg.mxu0
      %v305 = vmul.f32 %v278, 0.35355338
      %v306 = vmul.f32 %v302, 0.35355338
      %v307 = vsel %vm261, %v305, -inf
      %308 = vmax.xlane.f32.xlu0 %v307
      %v309 = vpop.xlane.xlu0 %308
      %v310 = vsel %vm261, %v306, -inf
      %311 = vmax.xlane.f32.xlu0 %v310
      %v312 = vpop.xlane.xlu0 %311
      %v313 = vsub.f32 %v305, %v309
      %v314 = vsub.f32 %v306, %v312
      %v315 = vmul.f32 %v313, 1.442695
      %v316 = vpow.pop %v315
      %v317 = vmul.f32 %v314, 1.442695
      %v318 = vpow.pop %v317
      %v319 = vsel %vm261, %v316, 0.0
      %320 = vadd.xlane.f32.xlu0 %v319
      %v321 = vpop.xlane.xlu0 %320
      %v322 = vsel %vm261, %v318, 0.0
      %323 = vadd.xlane.f32.xlu0 %v322
      %v324 = vpop.xlane.xlu0 %323
      %v325 = vrcp.pop %v321
      %v326 = vrcp.pop %v324
      %v327 = vmul.f32 %v316, %v325
      %v328 = vmul.f32 %v318, %v326
      %v329 = vpack.c.bf16 %v327, %v327
      %v330 = vpack.c.bf16 %v328, %v328
      %331 = vrot.lane.b32.xlu0 %v258, 48
      %v332 = vpop.permute.xlu0 %331
      %v334 = vsel %vm261, %v329, 0
      %v337 = vsel %vm175, %v332, 0
      %339 = vmatpush.bf16.msra.mxu0 0
      %340 = vmatpush.bf16.msra.mxu0 0
      %341 = vmatpush.bf16.msra.mxu0 0
      %342 = vmatpush.bf16.msra.mxu0 0
      %343 = vmatpush.bf16.msra.mxu0 0
      %344 = vmatpush.bf16.msra.mxu0 0
      %345 = vmatpush.bf16.msra.mxu0 0
      %346 = vmatpush.bf16.msra.mxu0 %v337
      %347 = vmatmul.bf16.gmra.mxu0 %v334
      %v348 = vpop.f32.mrf.mxu0
      %v349 = vadd.f32 0.0, %v348
      %v350 = vpop.f32.mrf.mxu0
      %351 = vdwg.mxu0
      %352 = vrot.lane.b32.xlu0 %v283, 48
      %v353 = vpop.permute.xlu0 %352
      %v355 = vsel %vm261, %v330, 0
      %v358 = vsel %vm175, %v353, 0
      %360 = vmatpush.bf16.msra.mxu0 0
      %361 = vmatpush.bf16.msra.mxu0 0
      %362 = vmatpush.bf16.msra.mxu0 0
      %363 = vmatpush.bf16.msra.mxu0 0
      %364 = vmatpush.bf16.msra.mxu0 0
      %365 = vmatpush.bf16.msra.mxu0 0
      %366 = vmatpush.bf16.msra.mxu0 0
      %367 = vmatpush.bf16.msra.mxu0 %v358
      %368 = vmatmul.bf16.gmra.mxu0 %v355
      %v369 = vpop.f32.mrf.mxu0
      %v370 = vadd.f32 0.0, %v369
      %v371 = vpop.f32.mrf.mxu0
      %372 = vdwg.mxu0
      %373 = vrot.lane.b32.xlu0 %v258, 120
      %v374 = vpop.permute.xlu0 %373
      %375 = vrot.lane.b32.xlu0 %v258, 80
      %v376 = vpop.permute.xlu0 %375
      %v378 = vsel %vm261, %v374, 0
      %v381 = vsel %vm261, %v376, 0
      %383 = vmatpush.bf16.xpose.msra.mxu0 0
      %384 = vmatpush.bf16.xpose.msra.mxu0 0
      %385 = vmatpush.bf16.xpose.msra.mxu0 0
      %386 = vmatpush.bf16.xpose.msra.mxu0 0
      %387 = vmatpush.bf16.xpose.msra.mxu0 0
      %388 = vmatpush.bf16.xpose.msra.mxu0 0
      %389 = vmatpush.bf16.xpose.msra.mxu0 0
      %390 = vmatpush.bf16.xpose.msra.mxu0 %v381
      %391 = vmatmul.bf16.gmra.mxu0 %v378
      %v392 = vpop.f32.mrf.mxu0
      %v393 = vadd.f32 0.0, %v392
      %v394 = vpop.f32.mrf.mxu0
      %395 = vdwg.mxu0
      %396 = vrot.lane.b32.xlu0 %v283, 120
      %v397 = vpop.permute.xlu0 %396
      %398 = vrot.lane.b32.xlu0 %v283, 80
      %v399 = vpop.permute.xlu0 %398
      %v401 = vsel %vm261, %v397, 0
      %v404 = vsel %vm261, %v399, 0
      %406 = vmatpush.bf16.xpose.msra.mxu0 0
      %407 = vmatpush.bf16.xpose.msra.mxu0 0
      %408 = vmatpush.bf16.xpose.msra.mxu0 0
      %409 = vmatpush.bf16.xpose.msra.mxu0 0
      %410 = vmatpush.bf16.xpose.msra.mxu0 0
      %411 = vmatpush.bf16.xpose.msra.mxu0 0
      %412 = vmatpush.bf16.xpose.msra.mxu0 0
      %413 = vmatpush.bf16.xpose.msra.mxu0 %v404
      %414 = vmatmul.bf16.gmra.mxu0 %v401
      %v415 = vpop.f32.mrf.mxu0
      %v416 = vadd.f32 0.0, %v415
      %v417 = vpop.f32.mrf.mxu0
      %418 = vdwg.mxu0
      %v419 = vmul.f32 %v393, 0.35355338
      %v420 = vmul.f32 %v416, 0.35355338
      %v421 = vsel %vm261, %v419, -inf
      %422 = vmax.xlane.f32.xlu0 %v421
      %v423 = vpop.xlane.xlu0 %422
      %v424 = vsel %vm261, %v420, -inf
      %425 = vmax.xlane.f32.xlu0 %v424
      %v426 = vpop.xlane.xlu0 %425
      %v427 = vsub.f32 %v419, %v423
      %v428 = vsub.f32 %v420, %v426
      %v429 = vmul.f32 %v427, 1.442695
      %v430 = vpow.pop %v429
      %v431 = vmul.f32 %v428, 1.442695
      %v432 = vpow.pop %v431
      %v433 = vsel %vm261, %v430, 0.0
      %434 = vadd.xlane.f32.xlu0 %v433
      %v435 = vpop.xlane.xlu0 %434
      %v436 = vsel %vm261, %v432, 0.0
      %437 = vadd.xlane.f32.xlu0 %v436
      %v438 = vpop.xlane.xlu0 %437
      %v439 = vrcp.pop %v435
      %v440 = vrcp.pop %v438
      %v441 = vmul.f32 %v430, %v439
      %v442 = vmul.f32 %v432, %v440
      %v443 = vpack.c.bf16 %v441, %v441
      %v444 = vpack.c.bf16 %v442, %v442
      %445 = vrot.lane.b32.xlu0 %v258, 40
      %v446 = vpop.permute.xlu0 %445
      %v448 = vsel %vm261, %v443, 0
      %v451 = vsel %vm175, %v446, 0
      %453 = vmatpush.bf16.msra.mxu0 0
      %454 = vmatpush.bf16.msra.mxu0 0
      %455 = vmatpush.bf16.msra.mxu0 0
      %456 = vmatpush.bf16.msra.mxu0 0
      %457 = vmatpush.bf16.msra.mxu0 0
      %458 = vmatpush.bf16.msra.mxu0 0
      %459 = vmatpush.bf16.msra.mxu0 0
      %460 = vmatpush.bf16.msra.mxu0 %v451
      %461 = vmatmul.bf16.gmra.mxu0 %v448
      %v462 = vpop.f32.mrf.mxu0
      %v463 = vadd.f32 0.0, %v462
      %v464 = vpop.f32.mrf.mxu0
      %465 = vdwg.mxu0
      %466 = vrot.lane.b32.xlu0 %v283, 40
      %v467 = vpop.permute.xlu0 %466
      %v469 = vsel %vm261, %v444, 0
      %v472 = vsel %vm175, %v467, 0
      %474 = vmatpush.bf16.msra.mxu0 0
      %475 = vmatpush.bf16.msra.mxu0 0
      %476 = vmatpush.bf16.msra.mxu0 0
      %477 = vmatpush.bf16.msra.mxu0 0
      %478 = vmatpush.bf16.msra.mxu0 0
      %479 = vmatpush.bf16.msra.mxu0 0
      %480 = vmatpush.bf16.msra.mxu0 0
      %481 = vmatpush.bf16.msra.mxu0 %v472
      %482 = vmatmul.bf16.gmra.mxu0 %v469
      %v483 = vpop.f32.mrf.mxu0
      %v484 = vadd.f32 0.0, %v483
      %v485 = vpop.f32.mrf.mxu0
      %486 = vdwg.mxu0
      %487 = vrot.lane.b32.xlu0 %v258, 112
      %v488 = vpop.permute.xlu0 %487
      %489 = vrot.lane.b32.xlu0 %v258, 72
      %v490 = vpop.permute.xlu0 %489
      %v492 = vsel %vm261, %v488, 0
      %v495 = vsel %vm261, %v490, 0
      %497 = vmatpush.bf16.xpose.msra.mxu0 0
      %498 = vmatpush.bf16.xpose.msra.mxu0 0
      %499 = vmatpush.bf16.xpose.msra.mxu0 0
      %500 = vmatpush.bf16.xpose.msra.mxu0 0
      %501 = vmatpush.bf16.xpose.msra.mxu0 0
      %502 = vmatpush.bf16.xpose.msra.mxu0 0
      %503 = vmatpush.bf16.xpose.msra.mxu0 0
      %504 = vmatpush.bf16.xpose.msra.mxu0 %v495
      %505 = vmatmul.bf16.gmra.mxu0 %v492
      %v506 = vpop.f32.mrf.mxu0
      %v507 = vadd.f32 0.0, %v506
      %v508 = vpop.f32.mrf.mxu0
      %509 = vdwg.mxu0
      %510 = vrot.lane.b32.xlu0 %v283, 112
      %v511 = vpop.permute.xlu0 %510
      %512 = vrot.lane.b32.xlu0 %v283, 72
      %v513 = vpop.permute.xlu0 %512
      %v515 = vsel %vm261, %v511, 0
      %v518 = vsel %vm261, %v513, 0
      %520 = vmatpush.bf16.xpose.msra.mxu0 0
      %521 = vmatpush.bf16.xpose.msra.mxu0 0
      %522 = vmatpush.bf16.xpose.msra.mxu0 0
      %523 = vmatpush.bf16.xpose.msra.mxu0 0
      %524 = vmatpush.bf16.xpose.msra.mxu0 0
      %525 = vmatpush.bf16.xpose.msra.mxu0 0
      %526 = vmatpush.bf16.xpose.msra.mxu0 0
      %527 = vmatpush.bf16.xpose.msra.mxu0 %v518
      %528 = vmatmul.bf16.gmra.mxu0 %v515
      %v529 = vpop.f32.mrf.mxu0
      %v530 = vadd.f32 0.0, %v529
      %v531 = vpop.f32.mrf.mxu0
      %532 = vdwg.mxu0
      %v533 = vmul.f32 %v507, 0.35355338
      %v534 = vmul.f32 %v530, 0.35355338
      %v535 = vsel %vm261, %v533, -inf
      %536 = vmax.xlane.f32.xlu0 %v535
      %v537 = vpop.xlane.xlu0 %536
      %v538 = vsel %vm261, %v534, -inf
      %539 = vmax.xlane.f32.xlu0 %v538
      %v540 = vpop.xlane.xlu0 %539
      %v541 = vsub.f32 %v533, %v537
      %v542 = vsub.f32 %v534, %v540
      %v543 = vmul.f32 %v541, 1.442695
      %v544 = vpow.pop %v543
      %v545 = vmul.f32 %v542, 1.442695
      %v546 = vpow.pop %v545
      %v547 = vsel %vm261, %v544, 0.0
      %548 = vadd.xlane.f32.xlu0 %v547
      %v549 = vpop.xlane.xlu0 %548
      %v550 = vsel %vm261, %v546, 0.0
      %551 = vadd.xlane.f32.xlu0 %v550
      %v552 = vpop.xlane.xlu0 %551
      %v553 = vrcp.pop %v549
      %v554 = vrcp.pop %v552
      %v555 = vmul.f32 %v544, %v553
      %v556 = vmul.f32 %v546, %v554
      %v557 = vpack.c.bf16 %v555, %v555
      %v558 = vpack.c.bf16 %v556, %v556
      %559 = vrot.lane.b32.xlu0 %v258, 32
      %v560 = vpop.permute.xlu0 %559
      %v562 = vsel %vm261, %v557, 0
      %v565 = vsel %vm175, %v560, 0
      %567 = vmatpush.bf16.msra.mxu0 0
      %568 = vmatpush.bf16.msra.mxu0 0
      %569 = vmatpush.bf16.msra.mxu0 0
      %570 = vmatpush.bf16.msra.mxu0 0
      %571 = vmatpush.bf16.msra.mxu0 0
      %572 = vmatpush.bf16.msra.mxu0 0
      %573 = vmatpush.bf16.msra.mxu0 0
      %574 = vmatpush.bf16.msra.mxu0 %v565
      %575 = vmatmul.bf16.gmra.mxu0 %v562
      %v576 = vpop.f32.mrf.mxu0
      %v577 = vadd.f32 0.0, %v576
      %v578 = vpop.f32.mrf.mxu0
      %579 = vdwg.mxu0
      %580 = vrot.lane.b32.xlu0 %v283, 32
      %v581 = vpop.permute.xlu0 %580
      %v583 = vsel %vm261, %v558, 0
      %v586 = vsel %vm175, %v581, 0
      %588 = vmatpush.bf16.msra.mxu0 0
      %589 = vmatpush.bf16.msra.mxu0 0
      %590 = vmatpush.bf16.msra.mxu0 0
      %591 = vmatpush.bf16.msra.mxu0 0
      %592 = vmatpush.bf16.msra.mxu0 0
      %593 = vmatpush.bf16.msra.mxu0 0
      %594 = vmatpush.bf16.msra.mxu0 0
      %595 = vmatpush.bf16.msra.mxu0 %v586
      %596 = vmatmul.bf16.gmra.mxu0 %v583
      %v597 = vpop.f32.mrf.mxu0
      %v598 = vadd.f32 0.0, %v597
      %v599 = vpop.f32.mrf.mxu0
      %600 = vdwg.mxu0
      %601 = vrot.lane.b32.xlu0 %v258, 104
      %v602 = vpop.permute.xlu0 %601
      %603 = vrot.lane.b32.xlu0 %v258, 64
      %v604 = vpop.permute.xlu0 %603
      %v606 = vsel %vm261, %v602, 0
      %v609 = vsel %vm261, %v604, 0
      %611 = vmatpush.bf16.xpose.msra.mxu0 0
      %612 = vmatpush.bf16.xpose.msra.mxu0 0
      %613 = vmatpush.bf16.xpose.msra.mxu0 0
      %614 = vmatpush.bf16.xpose.msra.mxu0 0
      %615 = vmatpush.bf16.xpose.msra.mxu0 0
      %616 = vmatpush.bf16.xpose.msra.mxu0 0
      %617 = vmatpush.bf16.xpose.msra.mxu0 0
      %618 = vmatpush.bf16.xpose.msra.mxu0 %v609
      %619 = vmatmul.bf16.gmra.mxu0 %v606
      %v620 = vpop.f32.mrf.mxu0
      %v621 = vadd.f32 0.0, %v620
      %v622 = vpop.f32.mrf.mxu0
      %623 = vdwg.mxu0
      %624 = vrot.lane.b32.xlu0 %v283, 104
      %v625 = vpop.permute.xlu0 %624
      %626 = vrot.lane.b32.xlu0 %v283, 64
      %v627 = vpop.permute.xlu0 %626
      %v629 = vsel %vm261, %v625, 0
      %v632 = vsel %vm261, %v627, 0
      %634 = vmatpush.bf16.xpose.msra.mxu0 0
      %635 = vmatpush.bf16.xpose.msra.mxu0 0
      %636 = vmatpush.bf16.xpose.msra.mxu0 0
      %637 = vmatpush.bf16.xpose.msra.mxu0 0
      %638 = vmatpush.bf16.xpose.msra.mxu0 0
      %639 = vmatpush.bf16.xpose.msra.mxu0 0
      %640 = vmatpush.bf16.xpose.msra.mxu0 0
      %641 = vmatpush.bf16.xpose.msra.mxu0 %v632
      %642 = vmatmul.bf16.gmra.mxu0 %v629
      %v643 = vpop.f32.mrf.mxu0
      %v644 = vadd.f32 0.0, %v643
      %v645 = vpop.f32.mrf.mxu0
      %646 = vdwg.mxu0
      %v647 = vmul.f32 %v621, 0.35355338
      %v648 = vmul.f32 %v644, 0.35355338
      %v649 = vsel %vm261, %v647, -inf
      %650 = vmax.xlane.f32.xlu0 %v649
      %v651 = vpop.xlane.xlu0 %650
      %v652 = vsel %vm261, %v648, -inf
      %653 = vmax.xlane.f32.xlu0 %v652
      %v654 = vpop.xlane.xlu0 %653
      %v655 = vsub.f32 %v647, %v651
      %v656 = vsub.f32 %v648, %v654
      %v657 = vmul.f32 %v655, 1.442695
      %v658 = vpow.pop %v657
      %v659 = vmul.f32 %v656, 1.442695
      %v660 = vpow.pop %v659
      %v661 = vsel %vm261, %v658, 0.0
      %662 = vadd.xlane.f32.xlu0 %v661
      %v663 = vpop.xlane.xlu0 %662
      %v664 = vsel %vm261, %v660, 0.0
      %665 = vadd.xlane.f32.xlu0 %v664
      %v666 = vpop.xlane.xlu0 %665
      %v667 = vrcp.pop %v663
      %v668 = vrcp.pop %v666
      %v669 = vmul.f32 %v658, %v667
      %v670 = vmul.f32 %v660, %v668
      %v671 = vpack.c.bf16 %v669, %v669
      %v672 = vpack.c.bf16 %v670, %v670
      %673 = vrot.lane.b32.xlu0 %v258, 24
      %v674 = vpop.permute.xlu0 %673
      %v676 = vsel %vm261, %v671, 0
      %v679 = vsel %vm175, %v674, 0
      %681 = vmatpush.bf16.msra.mxu0 0
      %682 = vmatpush.bf16.msra.mxu0 0
      %683 = vmatpush.bf16.msra.mxu0 0
      %684 = vmatpush.bf16.msra.mxu0 0
      %685 = vmatpush.bf16.msra.mxu0 0
      %686 = vmatpush.bf16.msra.mxu0 0
      %687 = vmatpush.bf16.msra.mxu0 0
      %688 = vmatpush.bf16.msra.mxu0 %v679
      %689 = vmatmul.bf16.gmra.mxu0 %v676
      %v690 = vpop.f32.mrf.mxu0
      %v691 = vadd.f32 0.0, %v690
      %v692 = vpop.f32.mrf.mxu0
      %693 = vdwg.mxu0
      %694 = vrot.lane.b32.xlu0 %v283, 24
      %v695 = vpop.permute.xlu0 %694
      %v697 = vsel %vm261, %v672, 0
      %v700 = vsel %vm175, %v695, 0
      %702 = vmatpush.bf16.msra.mxu0 0
      %703 = vmatpush.bf16.msra.mxu0 0
      %704 = vmatpush.bf16.msra.mxu0 0
      %705 = vmatpush.bf16.msra.mxu0 0
      %706 = vmatpush.bf16.msra.mxu0 0
      %707 = vmatpush.bf16.msra.mxu0 0
      %708 = vmatpush.bf16.msra.mxu0 0
      %709 = vmatpush.bf16.msra.mxu0 %v700
      %710 = vmatmul.bf16.gmra.mxu0 %v697
      %v711 = vpop.f32.mrf.mxu0
      %v712 = vadd.f32 0.0, %v711
      %v713 = vpop.f32.mrf.mxu0
      %714 = vdwg.mxu0
      %715 = vrot.lane.b32.xlu0 %v258, 96
      %v716 = vpop.permute.xlu0 %715
      %717 = vrot.lane.b32.xlu0 %v258, 56
      %v718 = vpop.permute.xlu0 %717
      %v720 = vsel %vm261, %v716, 0
      %v723 = vsel %vm261, %v718, 0
      %725 = vmatpush.bf16.xpose.msra.mxu0 0
      %726 = vmatpush.bf16.xpose.msra.mxu0 0
      %727 = vmatpush.bf16.xpose.msra.mxu0 0
      %728 = vmatpush.bf16.xpose.msra.mxu0 0
      %729 = vmatpush.bf16.xpose.msra.mxu0 0
      %730 = vmatpush.bf16.xpose.msra.mxu0 0
      %731 = vmatpush.bf16.xpose.msra.mxu0 0
      %732 = vmatpush.bf16.xpose.msra.mxu0 %v723
      %733 = vmatmul.bf16.gmra.mxu0 %v720
      %v734 = vpop.f32.mrf.mxu0
      %v735 = vadd.f32 0.0, %v734
      %v736 = vpop.f32.mrf.mxu0
      %737 = vdwg.mxu0
      %738 = vrot.lane.b32.xlu0 %v283, 96
      %v739 = vpop.permute.xlu0 %738
      %740 = vrot.lane.b32.xlu0 %v283, 56
      %v741 = vpop.permute.xlu0 %740
      %v743 = vsel %vm261, %v739, 0
      %v746 = vsel %vm261, %v741, 0
      %748 = vmatpush.bf16.xpose.msra.mxu0 0
      %749 = vmatpush.bf16.xpose.msra.mxu0 0
      %750 = vmatpush.bf16.xpose.msra.mxu0 0
      %751 = vmatpush.bf16.xpose.msra.mxu0 0
      %752 = vmatpush.bf16.xpose.msra.mxu0 0
      %753 = vmatpush.bf16.xpose.msra.mxu0 0
      %754 = vmatpush.bf16.xpose.msra.mxu0 0
      %755 = vmatpush.bf16.xpose.msra.mxu0 %v746
      %756 = vmatmul.bf16.gmra.mxu0 %v743
      %v757 = vpop.f32.mrf.mxu0
      %v758 = vadd.f32 0.0, %v757
      %v759 = vpop.f32.mrf.mxu0
      %760 = vdwg.mxu0
      %v761 = vmul.f32 %v735, 0.35355338
      %v762 = vmul.f32 %v758, 0.35355338
      %v763 = vsel %vm261, %v761, -inf
      %764 = vmax.xlane.f32.xlu0 %v763
      %v765 = vpop.xlane.xlu0 %764
      %v766 = vsel %vm261, %v762, -inf
      %767 = vmax.xlane.f32.xlu0 %v766
      %v768 = vpop.xlane.xlu0 %767
      %v769 = vsub.f32 %v761, %v765
      %v770 = vsub.f32 %v762, %v768
      %v771 = vmul.f32 %v769, 1.442695
      %v772 = vpow.pop %v771
      %v773 = vmul.f32 %v770, 1.442695
      %v774 = vpow.pop %v773
      %v775 = vsel %vm261, %v772, 0.0
      %776 = vadd.xlane.f32.xlu0 %v775
      %v777 = vpop.xlane.xlu0 %776
      %v778 = vsel %vm261, %v774, 0.0
      %779 = vadd.xlane.f32.xlu0 %v778
      %v780 = vpop.xlane.xlu0 %779
      %v781 = vrcp.pop %v777
      %v782 = vrcp.pop %v780
      %v783 = vmul.f32 %v772, %v781
      %v784 = vmul.f32 %v774, %v782
      %v785 = vpack.c.bf16 %v783, %v783
      %v786 = vpack.c.bf16 %v784, %v784
      %787 = vrot.lane.b32.xlu0 %v258, 16
      %v788 = vpop.permute.xlu0 %787
      %v790 = vsel %vm261, %v785, 0
      %v793 = vsel %vm175, %v788, 0
      %795 = vmatpush.bf16.msra.mxu0 0
      %796 = vmatpush.bf16.msra.mxu0 0
      %797 = vmatpush.bf16.msra.mxu0 0
      %798 = vmatpush.bf16.msra.mxu0 0
      %799 = vmatpush.bf16.msra.mxu0 0
      %800 = vmatpush.bf16.msra.mxu0 0
      %801 = vmatpush.bf16.msra.mxu0 0
      %802 = vmatpush.bf16.msra.mxu0 %v793
      %803 = vmatmul.bf16.gmra.mxu0 %v790
      %v804 = vpop.f32.mrf.mxu0
      %v805 = vadd.f32 0.0, %v804
      %v806 = vpop.f32.mrf.mxu0
      %807 = vdwg.mxu0
      %808 = vrot.lane.b32.xlu0 %v283, 16
      %v809 = vpop.permute.xlu0 %808
      %v811 = vsel %vm261, %v786, 0
      %v814 = vsel %vm175, %v809, 0
      %816 = vmatpush.bf16.msra.mxu0 0
      %817 = vmatpush.bf16.msra.mxu0 0
      %818 = vmatpush.bf16.msra.mxu0 0
      %819 = vmatpush.bf16.msra.mxu0 0
      %820 = vmatpush.bf16.msra.mxu0 0
      %821 = vmatpush.bf16.msra.mxu0 0
      %822 = vmatpush.bf16.msra.mxu0 0
      %823 = vmatpush.bf16.msra.mxu0 %v814
      %824 = vmatmul.bf16.gmra.mxu0 %v811
      %v825 = vpop.f32.mrf.mxu0
      %v826 = vadd.f32 0.0, %v825
      %v827 = vpop.f32.mrf.mxu0
      %828 = vdwg.mxu0
      %831 = vrot.lane.b32.xlu0 %v463, 8
      %v832 = vpop.permute.xlu0 %831
      %833 = vrot.lane.b32.xlu0 %v484, 8
      %v834 = vpop.permute.xlu0 %833
      %839 = vrot.lane.b32.xlu0 %v577, 16
      %v840 = vpop.permute.xlu0 %839
      %841 = vrot.lane.b32.xlu0 %v598, 16
      %v842 = vpop.permute.xlu0 %841
      %847 = vrot.lane.b32.xlu0 %v691, 24
      %v848 = vpop.permute.xlu0 %847
      %849 = vrot.lane.b32.xlu0 %v712, 24
      %v850 = vpop.permute.xlu0 %849
      %855 = vrot.lane.b32.xlu0 %v805, 32
      %v856 = vpop.permute.xlu0 %855
      %857 = vrot.lane.b32.xlu0 %v826, 32
      %v858 = vpop.permute.xlu0 %857
      %v861 = vsel %vm261, %v349, %v832
      %v862 = vsel %vm261, %v370, %v834
      %vm863 = vcmask 130048
      %v864 = vsel %vm863, %v861, %v840
      %v865 = vsel %vm863, %v862, %v842
      %vm866 = vcmask 195584
      %v867 = vsel %vm866, %v864, %v848
      %v868 = vsel %vm866, %v865, %v850
      %vm869 = vcmask 261120
      %v870 = vsel %vm869, %v867, %v856
      %v871 = vsel %vm869, %v868, %v858
      %v872 = vpack.c.bf16 %v871, %v870
      %s873 = smul.addr %s205, 4
      %s874 = scalar_lea.vmem %s5, %s873
      %v875 = vld [vmem:[%s874] sm:$0xf]
      %v876 = vld [vmem:[%s874 + $0x4] sm:$0xf]
      %v877 = vld [vmem:[%s874 + $0x8] sm:$0xf]
      %v878 = vld [vmem:[%s874 + $0xc] sm:$0xf]
      %v879 = vld [vmem:[%s874 + $0x10] sm:$0xf]
      %s880 = scalar_lea.vmem %s6, %s197
      %v881 = vld [vmem:[%s880] sm:$0x1]
      %v883 = vperm.slane %v881, 0
      %v890 = vunpack.c.l.b16 %v875
      %v891 = vunpack.c.l.b16 %v876
      %v892 = vunpack.c.l.b16 %v877
      %v893 = vunpack.c.l.b16 %v878
      %v894 = vunpack.c.l.b16 %v879
      %v895 = vpack.c.b16 %v891, %v890
      %v896 = vpack.c.b16 %v893, %v892
      %v897 = vpack.c.b16 %v894, %v894
      %v901 = vsel %vm233, %v872, 0
      %v904 = vsel %vm175, %v897, 0
      %906 = vmatpush.bf16.msra.mxu0 0
      %907 = vmatpush.bf16.msra.mxu0 0
      %908 = vmatpush.bf16.msra.mxu0 0
      %909 = vmatpush.bf16.msra.mxu0 0
      %910 = vmatpush.bf16.msra.mxu0 0
      %911 = vmatpush.bf16.msra.mxu0 %v904
      %912 = vmatpush.bf16.msra.mxu0 %v896
      %913 = vmatpush.bf16.msra.mxu0 %v895
      %914 = vmatmul.bf16.gmra.mxu0 %v901
      %v915 = vpop.f32.mrf.mxu0
      %v916 = vadd.f32 %v883, %v915
      %v917 = vpop.f32.mrf.mxu0
      %v918 = vadd.f32 %v883, %v917
      %919 = vdwg.mxu0
      %v920 = vadd.f32 %v202, %v916
      %v921 = vadd.f32 %v203, %v918
      %s922 = scalar_lea.vmem %s7, %s197
      %v923 = vld [vmem:[%s922] sm:$0x1]
      %s924 = scalar_lea.vmem %s8, %s197
      %v925 = vld [vmem:[%s924] sm:$0x1]
      %v926 = vsel %vm233, %v920, 0.0
      %927 = vadd.xlane.f32.xlu0 %v926
      %v928 = vpop.xlane.xlu0 %927
      %v929 = vsel %vm233, %v921, 0.0
      %930 = vadd.xlane.f32.xlu0 %v929
      %v931 = vpop.xlane.xlu0 %930
      %v932 = vrcp.pop 40.0
      %v933 = vmul.f32 40.0, %v932
      %v934 = vsub.f32 1.0, %v933
      %v935 = vmul.f32 %v932, %v934
      %v936 = vadd.f32 %v932, %v935
      %vm937 = vweird.f32 %v932
      %v938 = vsel %vm937, %v932, %v936
      %v939 = vmul.f32 %v928, %v938
      %v940 = vmul.f32 %v931, %v938
      %v941 = vsub.f32 %v920, %v939
      %v942 = vsub.f32 %v921, %v940
      %v943 = vmul.f32 %v941, %v941
      %v944 = vmul.f32 %v942, %v942
      %v945 = vsel %vm233, %v943, 0.0
      %946 = vadd.xlane.f32.xlu0 %v945
      %v947 = vpop.xlane.xlu0 %946
      %v948 = vsel %vm233, %v944, 0.0
      %949 = vadd.xlane.f32.xlu0 %v948
      %v950 = vpop.xlane.xlu0 %949
      %v951 = vmul.f32 %v947, %v938
      %v952 = vmul.f32 %v950, %v938
      %v953 = vadd.f32 %v951, 1e-05
      %v954 = vadd.f32 %v952, 1e-05
      %v955 = vrsqrt.pop %v953
      %v956 = vmul.f32 %v955, %v953
      %v957 = vmul.f32 %v956, %v955
      %v958 = vmul.f32 0.5, %v957
      %v959 = vsub.f32 1.5, %v958
      %v960 = vmul.f32 %v955, %v959
      %vm961 = vweird.f32 %v953
      %vm962 = vweird.f32 %v955
      %vm963 = vmor %vm961, %vm962
      %v964 = vsel %vm963, %v955, %v960
      %v965 = vrsqrt.pop %v954
      %v966 = vmul.f32 %v965, %v954
      %v967 = vmul.f32 %v966, %v965
      %v968 = vmul.f32 0.5, %v967
      %v969 = vsub.f32 1.5, %v968
      %v970 = vmul.f32 %v965, %v969
      %vm971 = vweird.f32 %v954
      %vm972 = vweird.f32 %v965
      %vm973 = vmor %vm971, %vm972
      %v974 = vsel %vm973, %v965, %v970
      %v975 = vmul.f32 %v941, %v964
      %v976 = vmul.f32 %v942, %v974
      %v978 = vperm.slane %v923, 0
      %v980 = vmul.f32 %v975, %v978
      %v981 = vmul.f32 %v976, %v978
      %v983 = vperm.slane %v925, 0
      %v985 = vadd.f32 %v980, %v983
      %v986 = vadd.f32 %v981, %v983
      %v987 = vpack.c.bf16 %v986, %v985
      %s988 = smul.u32 %s197, 40
      %s989 = smul.addr %s988, 4
      %s990 = scalar_lea.vmem %s11, %s989
      %v991 = vld [vmem:[%s990] sm:$0xff]
      %v992 = vld [vmem:[%s990 + $0x8] sm:$0xff]
      %v993 = vld [vmem:[%s990 + $0x10] sm:$0xff]
      %v994 = vld [vmem:[%s990 + $0x18] sm:$0xff]
      %v995 = vld [vmem:[%s990 + $0x20] sm:$0xff]
      %v996 = vld [vmem:[%s990 + $0x28] sm:$0xff]
      %v997 = vld [vmem:[%s990 + $0x30] sm:$0xff]
      %v998 = vld [vmem:[%s990 + $0x38] sm:$0xff]
      %v999 = vld [vmem:[%s990 + $0x40] sm:$0xff]
      %v1000 = vld [vmem:[%s990 + $0x48] sm:$0xff]
      %v1001 = vld [vmem:[%s990 + $0x50] sm:$0xff]
      %v1002 = vld [vmem:[%s990 + $0x58] sm:$0xff]
      %v1003 = vld [vmem:[%s990 + $0x60] sm:$0xff]
      %v1004 = vld [vmem:[%s990 + $0x68] sm:$0xff]
      %v1005 = vld [vmem:[%s990 + $0x70] sm:$0xff]
      %v1006 = vld [vmem:[%s990 + $0x78] sm:$0xff]
      %v1007 = vld [vmem:[%s990 + $0x80] sm:$0xff]
      %v1008 = vld [vmem:[%s990 + $0x88] sm:$0xff]
      %v1009 = vld [vmem:[%s990 + $0x90] sm:$0xff]
      %v1010 = vld [vmem:[%s990 + $0x98] sm:$0xff]
      %s1011 = smul.u32 %s197, 8
      %s1012 = scalar_lea.vmem %s12, %s1011
      %v1013 = vld [vmem:[%s1012] sm:$0xff]
      %v1015 = vperm.slane %v1013, 0
      %v1016 = vperm.slane %v1013, 1
      %v1017 = vperm.slane %v1013, 2
      %v1018 = vperm.slane %v1013, 3
      %v1019 = vperm.slane %v1013, 4
      %v1020 = vperm.slane %v1013, 5
      %v1021 = vperm.slane %v1013, 6
      %v1022 = vperm.slane %v1013, 7
      %v1051 = vunpack.c.l.b16 %v991
      %v1052 = vunpack.c.h.b16 %v991
      %v1053 = vunpack.c.l.b16 %v992
      %v1054 = vunpack.c.h.b16 %v992
      %v1055 = vunpack.c.l.b16 %v993
      %v1056 = vunpack.c.h.b16 %v993
      %v1057 = vunpack.c.l.b16 %v994
      %v1058 = vunpack.c.h.b16 %v994
      %v1059 = vunpack.c.l.b16 %v995
      %v1060 = vunpack.c.h.b16 %v995
      %v1061 = vunpack.c.l.b16 %v996
      %v1062 = vunpack.c.h.b16 %v996
      %v1063 = vunpack.c.l.b16 %v997
      %v1064 = vunpack.c.h.b16 %v997
      %v1065 = vunpack.c.l.b16 %v998
      %v1066 = vunpack.c.h.b16 %v998
      %v1067 = vunpack.c.l.b16 %v999
      %v1068 = vunpack.c.h.b16 %v999
      %v1069 = vunpack.c.l.b16 %v1000
      %v1070 = vunpack.c.h.b16 %v1000
      %v1071 = vunpack.c.l.b16 %v1001
      %v1072 = vunpack.c.h.b16 %v1001
      %v1073 = vunpack.c.l.b16 %v1002
      %v1074 = vunpack.c.h.b16 %v1002
      %v1075 = vunpack.c.l.b16 %v1003
      %v1076 = vunpack.c.h.b16 %v1003
      %v1077 = vunpack.c.l.b16 %v1004
      %v1078 = vunpack.c.h.b16 %v1004
      %v1079 = vunpack.c.l.b16 %v1005
      %v1080 = vunpack.c.h.b16 %v1005
      %v1081 = vunpack.c.l.b16 %v1006
      %v1082 = vunpack.c.h.b16 %v1006
      %v1083 = vunpack.c.l.b16 %v1007
      %v1084 = vunpack.c.h.b16 %v1007
      %v1085 = vunpack.c.l.b16 %v1008
      %v1086 = vunpack.c.h.b16 %v1008
      %v1087 = vunpack.c.l.b16 %v1009
      %v1088 = vunpack.c.h.b16 %v1009
      %v1089 = vunpack.c.l.b16 %v1010
      %v1090 = vunpack.c.h.b16 %v1010
      %v1091 = vpack.c.b16 %v1059, %v1051
      %v1092 = vpack.c.b16 %v1060, %v1052
      %v1093 = vpack.c.b16 %v1061, %v1053
      %v1094 = vpack.c.b16 %v1062, %v1054
      %v1095 = vpack.c.b16 %v1063, %v1055
      %v1096 = vpack.c.b16 %v1064, %v1056
      %v1097 = vpack.c.b16 %v1065, %v1057
      %v1098 = vpack.c.b16 %v1066, %v1058
      %v1099 = vpack.c.b16 %v1075, %v1067
      %v1100 = vpack.c.b16 %v1076, %v1068
      %v1101 = vpack.c.b16 %v1077, %v1069
      %v1102 = vpack.c.b16 %v1078, %v1070
      %v1103 = vpack.c.b16 %v1079, %v1071
      %v1104 = vpack.c.b16 %v1080, %v1072
      %v1105 = vpack.c.b16 %v1081, %v1073
      %v1106 = vpack.c.b16 %v1082, %v1074
      %v1107 = vpack.c.b16 %v1083, %v1083
      %v1108 = vpack.c.b16 %v1084, %v1084
      %v1109 = vpack.c.b16 %v1085, %v1085
      %v1110 = vpack.c.b16 %v1086, %v1086
      %v1111 = vpack.c.b16 %v1087, %v1087
      %v1112 = vpack.c.b16 %v1088, %v1088
      %v1113 = vpack.c.b16 %v1089, %v1089
      %v1114 = vpack.c.b16 %v1090, %v1090
      %v1132 = vsel %vm233, %v987, 0
      %v1135 = vsel %vm175, %v1107, 0
      %v1138 = vsel %vm175, %v1108, 0
      %v1141 = vsel %vm175, %v1109, 0
      %v1144 = vsel %vm175, %v1110, 0
      %v1147 = vsel %vm175, %v1111, 0
      %v1150 = vsel %vm175, %v1112, 0
      %v1153 = vsel %vm175, %v1113, 0
      %v1156 = vsel %vm175, %v1114, 0
      %1158 = vmatpush.bf16.msra.mxu0 0
      %1159 = vmatpush.bf16.msra.mxu0 0
      %1160 = vmatpush.bf16.msra.mxu0 0
      %1161 = vmatpush.bf16.msra.mxu0 0
      %1162 = vmatpush.bf16.msra.mxu0 0
      %1163 = vmatpush.bf16.msra.mxu0 %v1135
      %1164 = vmatpush.bf16.msra.mxu0 %v1099
      %1165 = vmatpush.bf16.msra.mxu0 %v1091
      %1166 = vmatmul.bf16.gmra.mxu0 %v1132
      %v1167 = vpop.f32.mrf.mxu0
      %v1168 = vadd.f32 %v1015, %v1167
      %v1169 = vpop.f32.mrf.mxu0
      %v1170 = vadd.f32 %v1015, %v1169
      %1171 = vdwg.mxu0
      %1172 = vmatpush.bf16.msra.mxu0 0
      %1173 = vmatpush.bf16.msra.mxu0 0
      %1174 = vmatpush.bf16.msra.mxu0 0
      %1175 = vmatpush.bf16.msra.mxu0 0
      %1176 = vmatpush.bf16.msra.mxu0 0
      %1177 = vmatpush.bf16.msra.mxu0 %v1138
      %1178 = vmatpush.bf16.msra.mxu0 %v1100
      %1179 = vmatpush.bf16.msra.mxu0 %v1092
      %1180 = vmatmul.bf16.gmra.mxu0 %v1132
      %v1181 = vpop.f32.mrf.mxu0
      %v1182 = vadd.f32 %v1016, %v1181
      %v1183 = vpop.f32.mrf.mxu0
      %v1184 = vadd.f32 %v1016, %v1183
      %1185 = vdwg.mxu0
      %1186 = vmatpush.bf16.msra.mxu0 0
      %1187 = vmatpush.bf16.msra.mxu0 0
      %1188 = vmatpush.bf16.msra.mxu0 0
      %1189 = vmatpush.bf16.msra.mxu0 0
      %1190 = vmatpush.bf16.msra.mxu0 0
      %1191 = vmatpush.bf16.msra.mxu0 %v1141
      %1192 = vmatpush.bf16.msra.mxu0 %v1101
      %1193 = vmatpush.bf16.msra.mxu0 %v1093
      %1194 = vmatmul.bf16.gmra.mxu0 %v1132
      %v1195 = vpop.f32.mrf.mxu0
      %v1196 = vadd.f32 %v1017, %v1195
      %v1197 = vpop.f32.mrf.mxu0
      %v1198 = vadd.f32 %v1017, %v1197
      %1199 = vdwg.mxu0
      %1200 = vmatpush.bf16.msra.mxu0 0
      %1201 = vmatpush.bf16.msra.mxu0 0
      %1202 = vmatpush.bf16.msra.mxu0 0
      %1203 = vmatpush.bf16.msra.mxu0 0
      %1204 = vmatpush.bf16.msra.mxu0 0
      %1205 = vmatpush.bf16.msra.mxu0 %v1144
      %1206 = vmatpush.bf16.msra.mxu0 %v1102
      %1207 = vmatpush.bf16.msra.mxu0 %v1094
      %1208 = vmatmul.bf16.gmra.mxu0 %v1132
      %v1209 = vpop.f32.mrf.mxu0
      %v1210 = vadd.f32 %v1018, %v1209
      %v1211 = vpop.f32.mrf.mxu0
      %v1212 = vadd.f32 %v1018, %v1211
      %1213 = vdwg.mxu0
      %1214 = vmatpush.bf16.msra.mxu0 0
      %1215 = vmatpush.bf16.msra.mxu0 0
      %1216 = vmatpush.bf16.msra.mxu0 0
      %1217 = vmatpush.bf16.msra.mxu0 0
      %1218 = vmatpush.bf16.msra.mxu0 0
      %1219 = vmatpush.bf16.msra.mxu0 %v1147
      %1220 = vmatpush.bf16.msra.mxu0 %v1103
      %1221 = vmatpush.bf16.msra.mxu0 %v1095
      %1222 = vmatmul.bf16.gmra.mxu0 %v1132
      %v1223 = vpop.f32.mrf.mxu0
      %v1224 = vadd.f32 %v1019, %v1223
      %v1225 = vpop.f32.mrf.mxu0
      %v1226 = vadd.f32 %v1019, %v1225
      %1227 = vdwg.mxu0
      %1228 = vmatpush.bf16.msra.mxu0 0
      %1229 = vmatpush.bf16.msra.mxu0 0
      %1230 = vmatpush.bf16.msra.mxu0 0
      %1231 = vmatpush.bf16.msra.mxu0 0
      %1232 = vmatpush.bf16.msra.mxu0 0
      %1233 = vmatpush.bf16.msra.mxu0 %v1150
      %1234 = vmatpush.bf16.msra.mxu0 %v1104
      %1235 = vmatpush.bf16.msra.mxu0 %v1096
      %1236 = vmatmul.bf16.gmra.mxu0 %v1132
      %v1237 = vpop.f32.mrf.mxu0
      %v1238 = vadd.f32 %v1020, %v1237
      %v1239 = vpop.f32.mrf.mxu0
      %v1240 = vadd.f32 %v1020, %v1239
      %1241 = vdwg.mxu0
      %1242 = vmatpush.bf16.msra.mxu0 0
      %1243 = vmatpush.bf16.msra.mxu0 0
      %1244 = vmatpush.bf16.msra.mxu0 0
      %1245 = vmatpush.bf16.msra.mxu0 0
      %1246 = vmatpush.bf16.msra.mxu0 0
      %1247 = vmatpush.bf16.msra.mxu0 %v1153
      %1248 = vmatpush.bf16.msra.mxu0 %v1105
      %1249 = vmatpush.bf16.msra.mxu0 %v1097
      %1250 = vmatmul.bf16.gmra.mxu0 %v1132
      %v1251 = vpop.f32.mrf.mxu0
      %v1252 = vadd.f32 %v1021, %v1251
      %v1253 = vpop.f32.mrf.mxu0
      %v1254 = vadd.f32 %v1021, %v1253
      %1255 = vdwg.mxu0
      %1256 = vmatpush.bf16.msra.mxu0 0
      %1257 = vmatpush.bf16.msra.mxu0 0
      %1258 = vmatpush.bf16.msra.mxu0 0
      %1259 = vmatpush.bf16.msra.mxu0 0
      %1260 = vmatpush.bf16.msra.mxu0 0
      %1261 = vmatpush.bf16.msra.mxu0 %v1156
      %1262 = vmatpush.bf16.msra.mxu0 %v1106
      %1263 = vmatpush.bf16.msra.mxu0 %v1098
      %1264 = vmatmul.bf16.gmra.mxu0 %v1132
      %v1265 = vpop.f32.mrf.mxu0
      %v1266 = vadd.f32 %v1022, %v1265
      %v1267 = vpop.f32.mrf.mxu0
      %v1268 = vadd.f32 %v1022, %v1267
      %1269 = vdwg.mxu0
      %v1270 = vmax.f32 %v1168, 0.0
      %v1271 = vmax.f32 %v1182, 0.0
      %v1272 = vmax.f32 %v1196, 0.0
      %v1273 = vmax.f32 %v1210, 0.0
      %v1274 = vmax.f32 %v1224, 0.0
      %v1275 = vmax.f32 %v1238, 0.0
      %v1276 = vmax.f32 %v1252, 0.0
      %v1277 = vmax.f32 %v1266, 0.0
      %v1278 = vmax.f32 %v1170, 0.0
      %v1279 = vmax.f32 %v1184, 0.0
      %v1280 = vmax.f32 %v1198, 0.0
      %v1281 = vmax.f32 %v1212, 0.0
      %v1282 = vmax.f32 %v1226, 0.0
      %v1283 = vmax.f32 %v1240, 0.0
      %v1284 = vmax.f32 %v1254, 0.0
      %v1285 = vmax.f32 %v1268, 0.0
      %v1286 = vpack.c.bf16 %v1278, %v1270
      %v1287 = vpack.c.bf16 %v1279, %v1271
      %v1288 = vpack.c.bf16 %v1280, %v1272
      %v1289 = vpack.c.bf16 %v1281, %v1273
      %v1290 = vpack.c.bf16 %v1282, %v1274
      %v1291 = vpack.c.bf16 %v1283, %v1275
      %v1292 = vpack.c.bf16 %v1284, %v1276
      %v1293 = vpack.c.bf16 %v1285, %v1277
      %s1294 = smul.u32 %s197, 128
      %s1295 = smul.addr %s1294, 4
      %s1296 = scalar_lea.vmem %s13, %s1295
      %v1297 = vld [vmem:[%s1296] sm:$0xf]
      %v1298 = vld [vmem:[%s1296 + $0x4] sm:$0xf]
      %v1299 = vld [vmem:[%s1296 + $0x8] sm:$0xf]
      %v1300 = vld [vmem:[%s1296 + $0xc] sm:$0xf]
      %v1301 = vld [vmem:[%s1296 + $0x10] sm:$0xf]
      %v1302 = vld [vmem:[%s1296 + $0x14] sm:$0xf]
      %v1303 = vld [vmem:[%s1296 + $0x18] sm:$0xf]
      %v1304 = vld [vmem:[%s1296 + $0x1c] sm:$0xf]
      %v1305 = vld [vmem:[%s1296 + $0x20] sm:$0xf]
      %v1306 = vld [vmem:[%s1296 + $0x24] sm:$0xf]
      %v1307 = vld [vmem:[%s1296 + $0x28] sm:$0xf]
      %v1308 = vld [vmem:[%s1296 + $0x2c] sm:$0xf]
      %v1309 = vld [vmem:[%s1296 + $0x30] sm:$0xf]
      %v1310 = vld [vmem:[%s1296 + $0x34] sm:$0xf]
      %v1311 = vld [vmem:[%s1296 + $0x38] sm:$0xf]
      %v1312 = vld [vmem:[%s1296 + $0x3c] sm:$0xf]
      %v1313 = vld [vmem:[%s1296 + $0x40] sm:$0xf]
      %v1314 = vld [vmem:[%s1296 + $0x44] sm:$0xf]
      %v1315 = vld [vmem:[%s1296 + $0x48] sm:$0xf]
      %v1316 = vld [vmem:[%s1296 + $0x4c] sm:$0xf]
      %v1317 = vld [vmem:[%s1296 + $0x50] sm:$0xf]
      %v1318 = vld [vmem:[%s1296 + $0x54] sm:$0xf]
      %v1319 = vld [vmem:[%s1296 + $0x58] sm:$0xf]
      %v1320 = vld [vmem:[%s1296 + $0x5c] sm:$0xf]
      %v1321 = vld [vmem:[%s1296 + $0x60] sm:$0xf]
      %v1322 = vld [vmem:[%s1296 + $0x64] sm:$0xf]
      %v1323 = vld [vmem:[%s1296 + $0x68] sm:$0xf]
      %v1324 = vld [vmem:[%s1296 + $0x6c] sm:$0xf]
      %v1325 = vld [vmem:[%s1296 + $0x70] sm:$0xf]
      %v1326 = vld [vmem:[%s1296 + $0x74] sm:$0xf]
      %v1327 = vld [vmem:[%s1296 + $0x78] sm:$0xf]
      %v1328 = vld [vmem:[%s1296 + $0x7c] sm:$0xf]
      %v1329 = vld [vmem:[%s1296 + $0x80] sm:$0xf]
      %v1330 = vld [vmem:[%s1296 + $0x84] sm:$0xf]
      %v1331 = vld [vmem:[%s1296 + $0x88] sm:$0xf]
      %v1332 = vld [vmem:[%s1296 + $0x8c] sm:$0xf]
      %v1333 = vld [vmem:[%s1296 + $0x90] sm:$0xf]
      %v1334 = vld [vmem:[%s1296 + $0x94] sm:$0xf]
      %v1335 = vld [vmem:[%s1296 + $0x98] sm:$0xf]
      %v1336 = vld [vmem:[%s1296 + $0x9c] sm:$0xf]
      %v1337 = vld [vmem:[%s1296 + $0xa0] sm:$0xf]
      %v1338 = vld [vmem:[%s1296 + $0xa4] sm:$0xf]
      %v1339 = vld [vmem:[%s1296 + $0xa8] sm:$0xf]
      %v1340 = vld [vmem:[%s1296 + $0xac] sm:$0xf]
      %v1341 = vld [vmem:[%s1296 + $0xb0] sm:$0xf]
      %v1342 = vld [vmem:[%s1296 + $0xb4] sm:$0xf]
      %v1343 = vld [vmem:[%s1296 + $0xb8] sm:$0xf]
      %v1344 = vld [vmem:[%s1296 + $0xbc] sm:$0xf]
      %v1345 = vld [vmem:[%s1296 + $0xc0] sm:$0xf]
      %v1346 = vld [vmem:[%s1296 + $0xc4] sm:$0xf]
      %v1347 = vld [vmem:[%s1296 + $0xc8] sm:$0xf]
      %v1348 = vld [vmem:[%s1296 + $0xcc] sm:$0xf]
      %v1349 = vld [vmem:[%s1296 + $0xd0] sm:$0xf]
      %v1350 = vld [vmem:[%s1296 + $0xd4] sm:$0xf]
      %v1351 = vld [vmem:[%s1296 + $0xd8] sm:$0xf]
      %v1352 = vld [vmem:[%s1296 + $0xdc] sm:$0xf]
      %v1353 = vld [vmem:[%s1296 + $0xe0] sm:$0xf]
      %v1354 = vld [vmem:[%s1296 + $0xe4] sm:$0xf]
      %v1355 = vld [vmem:[%s1296 + $0xe8] sm:$0xf]
      %v1356 = vld [vmem:[%s1296 + $0xec] sm:$0xf]
      %v1357 = vld [vmem:[%s1296 + $0xf0] sm:$0xf]
      %v1358 = vld [vmem:[%s1296 + $0xf4] sm:$0xf]
      %v1359 = vld [vmem:[%s1296 + $0xf8] sm:$0xf]
      %v1360 = vld [vmem:[%s1296 + $0xfc] sm:$0xf]
      %v1361 = vld [vmem:[%s1296 + $0x100] sm:$0xf]
      %v1362 = vld [vmem:[%s1296 + $0x104] sm:$0xf]
      %v1363 = vld [vmem:[%s1296 + $0x108] sm:$0xf]
      %v1364 = vld [vmem:[%s1296 + $0x10c] sm:$0xf]
      %v1365 = vld [vmem:[%s1296 + $0x110] sm:$0xf]
      %v1366 = vld [vmem:[%s1296 + $0x114] sm:$0xf]
      %v1367 = vld [vmem:[%s1296 + $0x118] sm:$0xf]
      %v1368 = vld [vmem:[%s1296 + $0x11c] sm:$0xf]
      %v1369 = vld [vmem:[%s1296 + $0x120] sm:$0xf]
      %v1370 = vld [vmem:[%s1296 + $0x124] sm:$0xf]
      %v1371 = vld [vmem:[%s1296 + $0x128] sm:$0xf]
      %v1372 = vld [vmem:[%s1296 + $0x12c] sm:$0xf]
      %v1373 = vld [vmem:[%s1296 + $0x130] sm:$0xf]
      %v1374 = vld [vmem:[%s1296 + $0x134] sm:$0xf]
      %v1375 = vld [vmem:[%s1296 + $0x138] sm:$0xf]
      %v1376 = vld [vmem:[%s1296 + $0x13c] sm:$0xf]
      %v1377 = vld [vmem:[%s1296 + $0x140] sm:$0xf]
      %v1378 = vld [vmem:[%s1296 + $0x144] sm:$0xf]
      %v1379 = vld [vmem:[%s1296 + $0x148] sm:$0xf]
      %v1380 = vld [vmem:[%s1296 + $0x14c] sm:$0xf]
      %v1381 = vld [vmem:[%s1296 + $0x150] sm:$0xf]
      %v1382 = vld [vmem:[%s1296 + $0x154] sm:$0xf]
      %v1383 = vld [vmem:[%s1296 + $0x158] sm:$0xf]
      %v1384 = vld [vmem:[%s1296 + $0x15c] sm:$0xf]
      %v1385 = vld [vmem:[%s1296 + $0x160] sm:$0xf]
      %v1386 = vld [vmem:[%s1296 + $0x164] sm:$0xf]
      %v1387 = vld [vmem:[%s1296 + $0x168] sm:$0xf]
      %v1388 = vld [vmem:[%s1296 + $0x16c] sm:$0xf]
      %v1389 = vld [vmem:[%s1296 + $0x170] sm:$0xf]
      %v1390 = vld [vmem:[%s1296 + $0x174] sm:$0xf]
      %v1391 = vld [vmem:[%s1296 + $0x178] sm:$0xf]
      %v1392 = vld [vmem:[%s1296 + $0x17c] sm:$0xf]
      %v1393 = vld [vmem:[%s1296 + $0x180] sm:$0xf]
      %v1394 = vld [vmem:[%s1296 + $0x184] sm:$0xf]
      %v1395 = vld [vmem:[%s1296 + $0x188] sm:$0xf]
      %v1396 = vld [vmem:[%s1296 + $0x18c] sm:$0xf]
      %v1397 = vld [vmem:[%s1296 + $0x190] sm:$0xf]
      %v1398 = vld [vmem:[%s1296 + $0x194] sm:$0xf]
      %v1399 = vld [vmem:[%s1296 + $0x198] sm:$0xf]
      %v1400 = vld [vmem:[%s1296 + $0x19c] sm:$0xf]
      %v1401 = vld [vmem:[%s1296 + $0x1a0] sm:$0xf]
      %v1402 = vld [vmem:[%s1296 + $0x1a4] sm:$0xf]
      %v1403 = vld [vmem:[%s1296 + $0x1a8] sm:$0xf]
      %v1404 = vld [vmem:[%s1296 + $0x1ac] sm:$0xf]
      %v1405 = vld [vmem:[%s1296 + $0x1b0] sm:$0xf]
      %v1406 = vld [vmem:[%s1296 + $0x1b4] sm:$0xf]
      %v1407 = vld [vmem:[%s1296 + $0x1b8] sm:$0xf]
      %v1408 = vld [vmem:[%s1296 + $0x1bc] sm:$0xf]
      %v1409 = vld [vmem:[%s1296 + $0x1c0] sm:$0xf]
      %v1410 = vld [vmem:[%s1296 + $0x1c4] sm:$0xf]
      %v1411 = vld [vmem:[%s1296 + $0x1c8] sm:$0xf]
      %v1412 = vld [vmem:[%s1296 + $0x1cc] sm:$0xf]
      %v1413 = vld [vmem:[%s1296 + $0x1d0] sm:$0xf]
      %v1414 = vld [vmem:[%s1296 + $0x1d4] sm:$0xf]
      %v1415 = vld [vmem:[%s1296 + $0x1d8] sm:$0xf]
      %v1416 = vld [vmem:[%s1296 + $0x1dc] sm:$0xf]
      %v1417 = vld [vmem:[%s1296 + $0x1e0] sm:$0xf]
      %v1418 = vld [vmem:[%s1296 + $0x1e4] sm:$0xf]
      %v1419 = vld [vmem:[%s1296 + $0x1e8] sm:$0xf]
      %v1420 = vld [vmem:[%s1296 + $0x1ec] sm:$0xf]
      %v1421 = vld [vmem:[%s1296 + $0x1f0] sm:$0xf]
      %v1422 = vld [vmem:[%s1296 + $0x1f4] sm:$0xf]
      %v1423 = vld [vmem:[%s1296 + $0x1f8] sm:$0xf]
      %v1424 = vld [vmem:[%s1296 + $0x1fc] sm:$0xf]
      %s1425 = scalar_lea.vmem %s14, %s197
      %v1426 = vld [vmem:[%s1425] sm:$0x1]
      %v1428 = vperm.slane %v1426, 0
      %v1558 = vunpack.c.l.b16 %v1297
      %v1559 = vunpack.c.l.b16 %v1298
      %v1560 = vunpack.c.l.b16 %v1299
      %v1561 = vunpack.c.l.b16 %v1300
      %v1562 = vunpack.c.l.b16 %v1301
      %v1563 = vunpack.c.l.b16 %v1302
      %v1564 = vunpack.c.l.b16 %v1303
      %v1565 = vunpack.c.l.b16 %v1304
      %v1566 = vunpack.c.l.b16 %v1305
      %v1567 = vunpack.c.l.b16 %v1306
      %v1568 = vunpack.c.l.b16 %v1307
      %v1569 = vunpack.c.l.b16 %v1308
      %v1570 = vunpack.c.l.b16 %v1309
      %v1571 = vunpack.c.l.b16 %v1310
      %v1572 = vunpack.c.l.b16 %v1311
      %v1573 = vunpack.c.l.b16 %v1312
      %v1574 = vunpack.c.l.b16 %v1313
      %v1575 = vunpack.c.l.b16 %v1314
      %v1576 = vunpack.c.l.b16 %v1315
      %v1577 = vunpack.c.l.b16 %v1316
      %v1578 = vunpack.c.l.b16 %v1317
      %v1579 = vunpack.c.l.b16 %v1318
      %v1580 = vunpack.c.l.b16 %v1319
      %v1581 = vunpack.c.l.b16 %v1320
      %v1582 = vunpack.c.l.b16 %v1321
      %v1583 = vunpack.c.l.b16 %v1322
      %v1584 = vunpack.c.l.b16 %v1323
      %v1585 = vunpack.c.l.b16 %v1324
      %v1586 = vunpack.c.l.b16 %v1325
      %v1587 = vunpack.c.l.b16 %v1326
      %v1588 = vunpack.c.l.b16 %v1327
      %v1589 = vunpack.c.l.b16 %v1328
      %v1590 = vunpack.c.l.b16 %v1329
      %v1591 = vunpack.c.l.b16 %v1330
      %v1592 = vunpack.c.l.b16 %v1331
      %v1593 = vunpack.c.l.b16 %v1332
      %v1594 = vunpack.c.l.b16 %v1333
      %v1595 = vunpack.c.l.b16 %v1334
      %v1596 = vunpack.c.l.b16 %v1335
      %v1597 = vunpack.c.l.b16 %v1336
      %v1598 = vunpack.c.l.b16 %v1337
      %v1599 = vunpack.c.l.b16 %v1338
      %v1600 = vunpack.c.l.b16 %v1339
      %v1601 = vunpack.c.l.b16 %v1340
      %v1602 = vunpack.c.l.b16 %v1341
      %v1603 = vunpack.c.l.b16 %v1342
      %v1604 = vunpack.c.l.b16 %v1343
      %v1605 = vunpack.c.l.b16 %v1344
      %v1606 = vunpack.c.l.b16 %v1345
      %v1607 = vunpack.c.l.b16 %v1346
      %v1608 = vunpack.c.l.b16 %v1347
      %v1609 = vunpack.c.l.b16 %v1348
      %v1610 = vunpack.c.l.b16 %v1349
      %v1611 = vunpack.c.l.b16 %v1350
      %v1612 = vunpack.c.l.b16 %v1351
      %v1613 = vunpack.c.l.b16 %v1352
      %v1614 = vunpack.c.l.b16 %v1353
      %v1615 = vunpack.c.l.b16 %v1354
      %v1616 = vunpack.c.l.b16 %v1355
      %v1617 = vunpack.c.l.b16 %v1356
      %v1618 = vunpack.c.l.b16 %v1357
      %v1619 = vunpack.c.l.b16 %v1358
      %v1620 = vunpack.c.l.b16 %v1359
      %v1621 = vunpack.c.l.b16 %v1360
      %v1622 = vunpack.c.l.b16 %v1361
      %v1623 = vunpack.c.l.b16 %v1362
      %v1624 = vunpack.c.l.b16 %v1363
      %v1625 = vunpack.c.l.b16 %v1364
      %v1626 = vunpack.c.l.b16 %v1365
      %v1627 = vunpack.c.l.b16 %v1366
      %v1628 = vunpack.c.l.b16 %v1367
      %v1629 = vunpack.c.l.b16 %v1368
      %v1630 = vunpack.c.l.b16 %v1369
      %v1631 = vunpack.c.l.b16 %v1370
      %v1632 = vunpack.c.l.b16 %v1371
      %v1633 = vunpack.c.l.b16 %v1372
      %v1634 = vunpack.c.l.b16 %v1373
      %v1635 = vunpack.c.l.b16 %v1374
      %v1636 = vunpack.c.l.b16 %v1375
      %v1637 = vunpack.c.l.b16 %v1376
      %v1638 = vunpack.c.l.b16 %v1377
      %v1639 = vunpack.c.l.b16 %v1378
      %v1640 = vunpack.c.l.b16 %v1379
      %v1641 = vunpack.c.l.b16 %v1380
      %v1642 = vunpack.c.l.b16 %v1381
      %v1643 = vunpack.c.l.b16 %v1382
      %v1644 = vunpack.c.l.b16 %v1383
      %v1645 = vunpack.c.l.b16 %v1384
      %v1646 = vunpack.c.l.b16 %v1385
      %v1647 = vunpack.c.l.b16 %v1386
      %v1648 = vunpack.c.l.b16 %v1387
      %v1649 = vunpack.c.l.b16 %v1388
      %v1650 = vunpack.c.l.b16 %v1389
      %v1651 = vunpack.c.l.b16 %v1390
      %v1652 = vunpack.c.l.b16 %v1391
      %v1653 = vunpack.c.l.b16 %v1392
      %v1654 = vunpack.c.l.b16 %v1393
      %v1655 = vunpack.c.l.b16 %v1394
      %v1656 = vunpack.c.l.b16 %v1395
      %v1657 = vunpack.c.l.b16 %v1396
      %v1658 = vunpack.c.l.b16 %v1397
      %v1659 = vunpack.c.l.b16 %v1398
      %v1660 = vunpack.c.l.b16 %v1399
      %v1661 = vunpack.c.l.b16 %v1400
      %v1662 = vunpack.c.l.b16 %v1401
      %v1663 = vunpack.c.l.b16 %v1402
      %v1664 = vunpack.c.l.b16 %v1403
      %v1665 = vunpack.c.l.b16 %v1404
      %v1666 = vunpack.c.l.b16 %v1405
      %v1667 = vunpack.c.l.b16 %v1406
      %v1668 = vunpack.c.l.b16 %v1407
      %v1669 = vunpack.c.l.b16 %v1408
      %v1670 = vunpack.c.l.b16 %v1409
      %v1671 = vunpack.c.l.b16 %v1410
      %v1672 = vunpack.c.l.b16 %v1411
      %v1673 = vunpack.c.l.b16 %v1412
      %v1674 = vunpack.c.l.b16 %v1413
      %v1675 = vunpack.c.l.b16 %v1414
      %v1676 = vunpack.c.l.b16 %v1415
      %v1677 = vunpack.c.l.b16 %v1416
      %v1678 = vunpack.c.l.b16 %v1417
      %v1679 = vunpack.c.l.b16 %v1418
      %v1680 = vunpack.c.l.b16 %v1419
      %v1681 = vunpack.c.l.b16 %v1420
      %v1682 = vunpack.c.l.b16 %v1421
      %v1683 = vunpack.c.l.b16 %v1422
      %v1684 = vunpack.c.l.b16 %v1423
      %v1685 = vunpack.c.l.b16 %v1424
      %v1686 = vpack.c.b16 %v1559, %v1558
      %v1687 = vpack.c.b16 %v1561, %v1560
      %v1688 = vpack.c.b16 %v1563, %v1562
      %v1689 = vpack.c.b16 %v1565, %v1564
      %v1690 = vpack.c.b16 %v1567, %v1566
      %v1691 = vpack.c.b16 %v1569, %v1568
      %v1692 = vpack.c.b16 %v1571, %v1570
      %v1693 = vpack.c.b16 %v1573, %v1572
      %v1694 = vpack.c.b16 %v1575, %v1574
      %v1695 = vpack.c.b16 %v1577, %v1576
      %v1696 = vpack.c.b16 %v1579, %v1578
      %v1697 = vpack.c.b16 %v1581, %v1580
      %v1698 = vpack.c.b16 %v1583, %v1582
      %v1699 = vpack.c.b16 %v1585, %v1584
      %v1700 = vpack.c.b16 %v1587, %v1586
      %v1701 = vpack.c.b16 %v1589, %v1588
      %v1702 = vpack.c.b16 %v1591, %v1590
      %v1703 = vpack.c.b16 %v1593, %v1592
      %v1704 = vpack.c.b16 %v1595, %v1594
      %v1705 = vpack.c.b16 %v1597, %v1596
      %v1706 = vpack.c.b16 %v1599, %v1598
      %v1707 = vpack.c.b16 %v1601, %v1600
      %v1708 = vpack.c.b16 %v1603, %v1602
      %v1709 = vpack.c.b16 %v1605, %v1604
      %v1710 = vpack.c.b16 %v1607, %v1606
      %v1711 = vpack.c.b16 %v1609, %v1608
      %v1712 = vpack.c.b16 %v1611, %v1610
      %v1713 = vpack.c.b16 %v1613, %v1612
      %v1714 = vpack.c.b16 %v1615, %v1614
      %v1715 = vpack.c.b16 %v1617, %v1616
      %v1716 = vpack.c.b16 %v1619, %v1618
      %v1717 = vpack.c.b16 %v1621, %v1620
      %v1718 = vpack.c.b16 %v1623, %v1622
      %v1719 = vpack.c.b16 %v1625, %v1624
      %v1720 = vpack.c.b16 %v1627, %v1626
      %v1721 = vpack.c.b16 %v1629, %v1628
      %v1722 = vpack.c.b16 %v1631, %v1630
      %v1723 = vpack.c.b16 %v1633, %v1632
      %v1724 = vpack.c.b16 %v1635, %v1634
      %v1725 = vpack.c.b16 %v1637, %v1636
      %v1726 = vpack.c.b16 %v1639, %v1638
      %v1727 = vpack.c.b16 %v1641, %v1640
      %v1728 = vpack.c.b16 %v1643, %v1642
      %v1729 = vpack.c.b16 %v1645, %v1644
      %v1730 = vpack.c.b16 %v1647, %v1646
      %v1731 = vpack.c.b16 %v1649, %v1648
      %v1732 = vpack.c.b16 %v1651, %v1650
      %v1733 = vpack.c.b16 %v1653, %v1652
      %v1734 = vpack.c.b16 %v1655, %v1654
      %v1735 = vpack.c.b16 %v1657, %v1656
      %v1736 = vpack.c.b16 %v1659, %v1658
      %v1737 = vpack.c.b16 %v1661, %v1660
      %v1738 = vpack.c.b16 %v1663, %v1662
      %v1739 = vpack.c.b16 %v1665, %v1664
      %v1740 = vpack.c.b16 %v1667, %v1666
      %v1741 = vpack.c.b16 %v1669, %v1668
      %v1742 = vpack.c.b16 %v1671, %v1670
      %v1743 = vpack.c.b16 %v1673, %v1672
      %v1744 = vpack.c.b16 %v1675, %v1674
      %v1745 = vpack.c.b16 %v1677, %v1676
      %v1746 = vpack.c.b16 %v1679, %v1678
      %v1747 = vpack.c.b16 %v1681, %v1680
      %v1748 = vpack.c.b16 %v1683, %v1682
      %v1749 = vpack.c.b16 %v1685, %v1684
      %1814 = vmatpush.bf16.msra.mxu0 %v1693
      %1815 = vmatpush.bf16.msra.mxu0 %v1692
      %1816 = vmatpush.bf16.msra.mxu0 %v1691
      %1817 = vmatpush.bf16.msra.mxu0 %v1690
      %1818 = vmatpush.bf16.msra.mxu0 %v1689
      %1819 = vmatpush.bf16.msra.mxu0 %v1688
      %1820 = vmatpush.bf16.msra.mxu0 %v1687
      %1821 = vmatpush.bf16.msra.mxu0 %v1686
      %1822 = vmatmul.bf16.gmra.mxu0 %v1286
      %v1823 = vpop.f32.mrf.mxu0
      %v1824 = vadd.f32 %v1428, %v1823
      %v1825 = vpop.f32.mrf.mxu0
      %v1826 = vadd.f32 %v1428, %v1825
      %1827 = vdwg.mxu0
      %1828 = vmatpush.bf16.msra.mxu0 %v1701
      %1829 = vmatpush.bf16.msra.mxu0 %v1700
      %1830 = vmatpush.bf16.msra.mxu0 %v1699
      %1831 = vmatpush.bf16.msra.mxu0 %v1698
      %1832 = vmatpush.bf16.msra.mxu0 %v1697
      %1833 = vmatpush.bf16.msra.mxu0 %v1696
      %1834 = vmatpush.bf16.msra.mxu0 %v1695
      %1835 = vmatpush.bf16.msra.mxu0 %v1694
      %1836 = vmatmul.bf16.gmra.mxu0 %v1287
      %v1837 = vpop.f32.mrf.mxu0
      %v1838 = vadd.f32 %v1824, %v1837
      %v1839 = vpop.f32.mrf.mxu0
      %v1840 = vadd.f32 %v1826, %v1839
      %1841 = vdwg.mxu0
      %1842 = vmatpush.bf16.msra.mxu0 %v1709
      %1843 = vmatpush.bf16.msra.mxu0 %v1708
      %1844 = vmatpush.bf16.msra.mxu0 %v1707
      %1845 = vmatpush.bf16.msra.mxu0 %v1706
      %1846 = vmatpush.bf16.msra.mxu0 %v1705
      %1847 = vmatpush.bf16.msra.mxu0 %v1704
      %1848 = vmatpush.bf16.msra.mxu0 %v1703
      %1849 = vmatpush.bf16.msra.mxu0 %v1702
      %1850 = vmatmul.bf16.gmra.mxu0 %v1288
      %v1851 = vpop.f32.mrf.mxu0
      %v1852 = vadd.f32 %v1838, %v1851
      %v1853 = vpop.f32.mrf.mxu0
      %v1854 = vadd.f32 %v1840, %v1853
      %1855 = vdwg.mxu0
      %1856 = vmatpush.bf16.msra.mxu0 %v1717
      %1857 = vmatpush.bf16.msra.mxu0 %v1716
      %1858 = vmatpush.bf16.msra.mxu0 %v1715
      %1859 = vmatpush.bf16.msra.mxu0 %v1714
      %1860 = vmatpush.bf16.msra.mxu0 %v1713
      %1861 = vmatpush.bf16.msra.mxu0 %v1712
      %1862 = vmatpush.bf16.msra.mxu0 %v1711
      %1863 = vmatpush.bf16.msra.mxu0 %v1710
      %1864 = vmatmul.bf16.gmra.mxu0 %v1289
      %v1865 = vpop.f32.mrf.mxu0
      %v1866 = vadd.f32 %v1852, %v1865
      %v1867 = vpop.f32.mrf.mxu0
      %v1868 = vadd.f32 %v1854, %v1867
      %1869 = vdwg.mxu0
      %1870 = vmatpush.bf16.msra.mxu0 %v1725
      %1871 = vmatpush.bf16.msra.mxu0 %v1724
      %1872 = vmatpush.bf16.msra.mxu0 %v1723
      %1873 = vmatpush.bf16.msra.mxu0 %v1722
      %1874 = vmatpush.bf16.msra.mxu0 %v1721
      %1875 = vmatpush.bf16.msra.mxu0 %v1720
      %1876 = vmatpush.bf16.msra.mxu0 %v1719
      %1877 = vmatpush.bf16.msra.mxu0 %v1718
      %1878 = vmatmul.bf16.gmra.mxu0 %v1290
      %v1879 = vpop.f32.mrf.mxu0
      %v1880 = vadd.f32 %v1866, %v1879
      %v1881 = vpop.f32.mrf.mxu0
      %v1882 = vadd.f32 %v1868, %v1881
      %1883 = vdwg.mxu0
      %1884 = vmatpush.bf16.msra.mxu0 %v1733
      %1885 = vmatpush.bf16.msra.mxu0 %v1732
      %1886 = vmatpush.bf16.msra.mxu0 %v1731
      %1887 = vmatpush.bf16.msra.mxu0 %v1730
      %1888 = vmatpush.bf16.msra.mxu0 %v1729
      %1889 = vmatpush.bf16.msra.mxu0 %v1728
      %1890 = vmatpush.bf16.msra.mxu0 %v1727
      %1891 = vmatpush.bf16.msra.mxu0 %v1726
      %1892 = vmatmul.bf16.gmra.mxu0 %v1291
      %v1893 = vpop.f32.mrf.mxu0
      %v1894 = vadd.f32 %v1880, %v1893
      %v1895 = vpop.f32.mrf.mxu0
      %v1896 = vadd.f32 %v1882, %v1895
      %1897 = vdwg.mxu0
      %1898 = vmatpush.bf16.msra.mxu0 %v1741
      %1899 = vmatpush.bf16.msra.mxu0 %v1740
      %1900 = vmatpush.bf16.msra.mxu0 %v1739
      %1901 = vmatpush.bf16.msra.mxu0 %v1738
      %1902 = vmatpush.bf16.msra.mxu0 %v1737
      %1903 = vmatpush.bf16.msra.mxu0 %v1736
      %1904 = vmatpush.bf16.msra.mxu0 %v1735
      %1905 = vmatpush.bf16.msra.mxu0 %v1734
      %1906 = vmatmul.bf16.gmra.mxu0 %v1292
      %v1907 = vpop.f32.mrf.mxu0
      %v1908 = vadd.f32 %v1894, %v1907
      %v1909 = vpop.f32.mrf.mxu0
      %v1910 = vadd.f32 %v1896, %v1909
      %1911 = vdwg.mxu0
      %1912 = vmatpush.bf16.msra.mxu0 %v1749
      %1913 = vmatpush.bf16.msra.mxu0 %v1748
      %1914 = vmatpush.bf16.msra.mxu0 %v1747
      %1915 = vmatpush.bf16.msra.mxu0 %v1746
      %1916 = vmatpush.bf16.msra.mxu0 %v1745
      %1917 = vmatpush.bf16.msra.mxu0 %v1744
      %1918 = vmatpush.bf16.msra.mxu0 %v1743
      %1919 = vmatpush.bf16.msra.mxu0 %v1742
      %1920 = vmatmul.bf16.gmra.mxu0 %v1293
      %v1921 = vpop.f32.mrf.mxu0
      %v1922 = vadd.f32 %v1908, %v1921
      %v1923 = vpop.f32.mrf.mxu0
      %v1924 = vadd.f32 %v1910, %v1923
      %1925 = vdwg.mxu0
      %v1926 = vadd.f32 %v985, %v1922
      %v1927 = vadd.f32 %v986, %v1924
      %s1928 = scalar_lea.vmem %s9, %s197
      %v1929 = vld [vmem:[%s1928] sm:$0x1]
      %s1930 = scalar_lea.vmem %s10, %s197
      %v1931 = vld [vmem:[%s1930] sm:$0x1]
      %v1932 = vsel %vm233, %v1926, 0.0
      %1933 = vadd.xlane.f32.xlu0 %v1932
      %v1934 = vpop.xlane.xlu0 %1933
      %v1935 = vsel %vm233, %v1927, 0.0
      %1936 = vadd.xlane.f32.xlu0 %v1935
      %v1937 = vpop.xlane.xlu0 %1936
      %v1938 = vmul.f32 %v1934, %v938
      %v1939 = vmul.f32 %v1937, %v938
      %v1940 = vsub.f32 %v1926, %v1938
      %v1941 = vsub.f32 %v1927, %v1939
      %v1942 = vmul.f32 %v1940, %v1940
      %v1943 = vmul.f32 %v1941, %v1941
      %v1944 = vsel %vm233, %v1942, 0.0
      %1945 = vadd.xlane.f32.xlu0 %v1944
      %v1946 = vpop.xlane.xlu0 %1945
      %v1947 = vsel %vm233, %v1943, 0.0
      %1948 = vadd.xlane.f32.xlu0 %v1947
      %v1949 = vpop.xlane.xlu0 %1948
      %v1950 = vmul.f32 %v1946, %v938
      %v1951 = vmul.f32 %v1949, %v938
      %v1952 = vadd.f32 %v1950, 1e-05
      %v1953 = vadd.f32 %v1951, 1e-05
      %v1954 = vrsqrt.pop %v1952
      %v1955 = vmul.f32 %v1954, %v1952
      %v1956 = vmul.f32 %v1955, %v1954
      %v1957 = vmul.f32 0.5, %v1956
      %v1958 = vsub.f32 1.5, %v1957
      %v1959 = vmul.f32 %v1954, %v1958
      %vm1960 = vweird.f32 %v1952
      %vm1961 = vweird.f32 %v1954
      %vm1962 = vmor %vm1960, %vm1961
      %v1963 = vsel %vm1962, %v1954, %v1959
      %v1964 = vrsqrt.pop %v1953
      %v1965 = vmul.f32 %v1964, %v1953
      %v1966 = vmul.f32 %v1965, %v1964
      %v1967 = vmul.f32 0.5, %v1966
      %v1968 = vsub.f32 1.5, %v1967
      %v1969 = vmul.f32 %v1964, %v1968
      %vm1970 = vweird.f32 %v1953
      %vm1971 = vweird.f32 %v1964
      %vm1972 = vmor %vm1970, %vm1971
      %v1973 = vsel %vm1972, %v1964, %v1969
      %v1974 = vmul.f32 %v1940, %v1963
      %v1975 = vmul.f32 %v1941, %v1973
      %v1977 = vperm.slane %v1929, 0
      %v1979 = vmul.f32 %v1974, %v1977
      %v1980 = vmul.f32 %v1975, %v1977
      %v1982 = vperm.slane %v1931, 0
      %v1984 = vadd.f32 %v1979, %v1982
      %v1985 = vadd.f32 %v1980, %v1982
    $region90: #{neural_net_forward.1} parent=1 // loop_footer
      %s201 = sadd.s32 1, %s197
    $region91: #{neural_net_forward.1} parent=1 // loop_footer_branch
      %196 = sbr.rel target = $region87
    $region92: #{neural_net_forward.1} parent=1 // loop_exit
      _
    %v1986 = vmax.f32 %v202, %v203
    %v1987 = vadd.f32 %v202, %v203
    %v1988 = vmul.f32 %v1987, 0.5
    %v1989 = vpack.c.bf16 %v1986, %v1986
    %v1990 = vld [vmem:[%s15] sm:$0xf]
    %v1991 = vld [vmem:[%s15 + $0x4] sm:$0xf]
    %v1992 = vld [vmem:[%s15 + $0x8] sm:$0xf]
    %v1993 = vld [vmem:[%s15 + $0xc] sm:$0xf]
    %v1994 = vld [vmem:[%s15 + $0x10] sm:$0xf]
    %v1995 = vpack.c.bf16 %v1988, %v1988
    %v1996 = vld [vmem:[%s16] sm:$0xf]
    %v1997 = vld [vmem:[%s16 + $0x4] sm:$0xf]
    %v1998 = vld [vmem:[%s16 + $0x8] sm:$0xf]
    %v1999 = vld [vmem:[%s16 + $0xc] sm:$0xf]
    %v2000 = vld [vmem:[%s16 + $0x10] sm:$0xf]
    %v2006 = vunpack.c.l.b16 %v1996
    %v2007 = vunpack.c.l.b16 %v1997
    %v2008 = vunpack.c.l.b16 %v1998
    %v2009 = vunpack.c.l.b16 %v1999
    %v2010 = vunpack.c.l.b16 %v2000
    %v2011 = vpack.c.b16 %v2007, %v2006
    %v2012 = vpack.c.b16 %v2009, %v2008
    %v2013 = vpack.c.b16 %v2010, %v2010
    %vm2016 = vcmask 326656
    %v2018 = vsel %vm2016, %v1995, 0
    %v2021 = vsel %vm175, %v2013, 0
    %2023 = vmatpush.bf16.msra.mxu0 0
    %2024 = vmatpush.bf16.msra.mxu0 0
    %2025 = vmatpush.bf16.msra.mxu0 0
    %2026 = vmatpush.bf16.msra.mxu0 0
    %2027 = vmatpush.bf16.msra.mxu0 0
    %2028 = vmatpush.bf16.msra.mxu0 %v2021
    %2029 = vmatpush.bf16.msra.mxu0 %v2012
    %2030 = vmatpush.bf16.msra.mxu0 %v2011
    %2031 = vmatmul.bf16.gmra.mxu0 %v2018
    %v2032 = vpop.f32.mrf.mxu0
    %v2033 = vadd.f32 0.0, %v2032
    %v2034 = vpop.f32.mrf.mxu0
    %2035 = vdwg.mxu0
    %v2041 = vunpack.c.l.b16 %v1990
    %v2042 = vunpack.c.l.b16 %v1991
    %v2043 = vunpack.c.l.b16 %v1992
    %v2044 = vunpack.c.l.b16 %v1993
    %v2045 = vunpack.c.l.b16 %v1994
    %v2046 = vpack.c.b16 %v2042, %v2041
    %v2047 = vpack.c.b16 %v2044, %v2043
    %v2048 = vpack.c.b16 %v2045, %v2045
    %v2052 = vsel %vm2016, %v1989, 0
    %v2055 = vsel %vm175, %v2048, 0
    %2057 = vmatpush.bf16.msra.mxu0 0
    %2058 = vmatpush.bf16.msra.mxu0 0
    %2059 = vmatpush.bf16.msra.mxu0 0
    %2060 = vmatpush.bf16.msra.mxu0 0
    %2061 = vmatpush.bf16.msra.mxu0 0
    %2062 = vmatpush.bf16.msra.mxu0 %v2055
    %2063 = vmatpush.bf16.msra.mxu0 %v2047
    %2064 = vmatpush.bf16.msra.mxu0 %v2046
    %2065 = vmatmul.bf16.gmra.mxu0 %v2052
    %v2066 = vpop.f32.mrf.mxu0
    %v2067 = vadd.f32 %v2033, %v2066
    %v2068 = vpop.f32.mrf.mxu0
    %2069 = vdwg.mxu0
    %v2070 = vld [vmem:[%s17] sm:$0x1]
    %v2072 = vperm.slane %v2070, 0
    %v2074 = vadd.f32 %v2067, %v2072
    %v2075 = vmax.f32 %v2074, 0.0
    %v2076 = vpack.c.bf16 %v2075, %v2075
    %v2077 = vld [vmem:[%s18] sm:$0xf]
    %v2078 = vld [vmem:[%s18 + $0x4] sm:$0xf]
    %v2079 = vld [vmem:[%s18 + $0x8] sm:$0xf]
    %v2080 = vld [vmem:[%s18 + $0xc] sm:$0xf]
    %v2081 = vld [vmem:[%s18 + $0x10] sm:$0xf]
    %v2082 = vld [vmem:[%s18 + $0x14] sm:$0xf]
    %v2083 = vld [vmem:[%s18 + $0x18] sm:$0xf]
    %v2084 = vld [vmem:[%s18 + $0x1c] sm:$0xf]
    %v2085 = vld [vmem:[%s18 + $0x20] sm:$0xf]
    %v2086 = vld [vmem:[%s18 + $0x24] sm:$0xf]
    %v2087 = vld [vmem:[%s19] sm:$0x1]
    %v2089 = vperm.slane %v2087, 0
    %v2101 = vunpack.c.l.b16 %v2077
    %v2102 = vunpack.c.l.b16 %v2078
    %v2103 = vunpack.c.l.b16 %v2079
    %v2104 = vunpack.c.l.b16 %v2080
    %v2105 = vunpack.c.l.b16 %v2081
    %v2106 = vunpack.c.l.b16 %v2082
    %v2107 = vunpack.c.l.b16 %v2083
    %v2108 = vunpack.c.l.b16 %v2084
    %v2109 = vunpack.c.l.b16 %v2085
    %v2110 = vunpack.c.l.b16 %v2086
    %v2111 = vpack.c.b16 %v2102, %v2101
    %v2112 = vpack.c.b16 %v2104, %v2103
    %v2113 = vpack.c.b16 %v2106, %v2105
    %v2114 = vpack.c.b16 %v2108, %v2107
    %v2115 = vpack.c.b16 %v2110, %v2109
    %vm2121 = vcmask 654336
    %v2123 = vsel %vm2121, %v2076, 0
    %2125 = vmatpush.bf16.msra.mxu0 0
    %2126 = vmatpush.bf16.msra.mxu0 0
    %2127 = vmatpush.bf16.msra.mxu0 0
    %2128 = vmatpush.bf16.msra.mxu0 %v2115
    %2129 = vmatpush.bf16.msra.mxu0 %v2114
    %2130 = vmatpush.bf16.msra.mxu0 %v2113
    %2131 = vmatpush.bf16.msra.mxu0 %v2112
    %2132 = vmatpush.bf16.msra.mxu0 %v2111
    %2133 = vmatmul.bf16.gmra.mxu0 %v2123
    %v2134 = vpop.f32.mrf.mxu0
    %v2135 = vadd.f32 %v2089, %v2134
    %v2136 = vpop.f32.mrf.mxu0
    %2137 = vdwg.mxu0
    %v2138 = vxor.u32 %v2135, 2147483648
    %v2139 = vmul.f32 %v2138, 1.442695
    %v2140 = vpow.pop %v2139
    %v2141 = vadd.f32 %v2140, 1.0
    %v2142 = vrcp.pop %v2141
    %v2143 = vmul.f32 %v2141, %v2142
    %v2144 = vsub.f32 1.0, %v2143
    %v2145 = vmul.f32 %v2142, %v2144
    %v2146 = vadd.f32 %v2142, %v2145
    %vm2147 = vweird.f32 %v2141
    %vm2148 = vweird.f32 %v2142
    %vm2149 = vmor %vm2147, %vm2148
    %v2150 = vsel %vm2149, %v2142, %v2146
    %v2151 = vand.u32 2147483647, %v2141
    %vm2152 = vcmp.eq.f32.partialorder %v2151, 8.507059e+37
    %v2153 = vand.u32 %v2141, 2147483648
    %v2154 = vor.u32 1.1754944e-38, %v2153
    %v2155 = vsel %vm2152, %v2154, %v2150
    %v2156 = vmul.f32 1.0, %v2155
    %2157 = vst [vmem:[%s20] sm:$0xff] %v2156
    // Predicated region
    $region93: #{neural_net_forward.1} parent=1 // pred_check
      _
    $region94: #{neural_net_forward.1} parent=1 // pred_check_branch
      %2159 = sbr.rel (0) target = $region96
    $region95: #{neural_net_forward.1} parent=1 // pred_region
      _
    $region96: #{neural_net_forward.1} parent=1 // pred_fallthru
      _
    // Predicated region
    $region97: #{neural_net_forward.1} parent=1 // pred_check
      _
    $region98: #{neural_net_forward.1} parent=1 // pred_check_branch
      %2161 = sbr.rel (0) target = $region100
    $region99: #{neural_net_forward.1} parent=1 // pred_region
      _
    $region100: #{neural_net_forward.1} parent=1 // pred_fallthru
      _
    %2162 = vsyncpa [#allocation3], 1

</llo_original>
